<compile_context>
chip_gen: v6e
topology: v6e:2x2x1
jax: 0.10.0
libtpu: 0.0.40
codegen_flags: <defaults>
</compile_context>

<pallas_src>
import functools

import jax
import jax.numpy as jnp
from jax.experimental import pallas as pl
from jax.experimental.pallas import tpu as pltpu

# --- small, module-consistent sizes (synthetic stand-ins for 2048 / 512) ---
IN_DIM = 256
DIM = 256
NUM_JOINTS = 17
NUM_XYZ = 3
OUT_DIM = NUM_JOINTS * NUM_XYZ       # 51
NEG_SLOPE = 0.2


def _leaky_relu(v):
    return jnp.where(v > 0, v, NEG_SLOPE * v)


def lifting_kernel(x_ref, w0_ref, b0_ref, w1_ref, b1_ref, w2_ref, b2_ref,
                   wf_ref, bf_ref, out_ref):
    # Cast the activation tile to bf16 here (not in the wrapper): the cast runs on the
    # VPU underneath the MXU work, and the kernel's x read is the only pass over x.
    x = x_ref[...].astype(jnp.bfloat16)

    # self.linear: Linear(2048, dim) + LeakyReLU(0.2).  bf16 x bf16 -> f32 accumulation;
    # all elementwise work stays f32 (v5e's VPU has no bf16 path, free on v6e/v7x).
    h = jnp.dot(x, w0_ref[...], preferred_element_type=jnp.float32) + b0_ref[...]
    h = _leaky_relu(h)

    # Res_Block: Linear -> LeakyReLU -> Linear, residual add, LeakyReLU.
    r = jnp.dot(h.astype(jnp.bfloat16), w1_ref[...],
                preferred_element_type=jnp.float32) + b1_ref[...]
    r = _leaky_relu(r)
    r = jnp.dot(r.astype(jnp.bfloat16), w2_ref[...],
                preferred_element_type=jnp.float32) + b2_ref[...]
    h = _leaky_relu(h + r)

    # self.final: Linear(dim, num_joints*num_xyz), zero-padded to a multiple of 128 lanes
    # so the store is a full-width lane-dense vst; emitted in bf16 to halve the writeback.
    joints = jnp.dot(h.astype(jnp.bfloat16), wf_ref[...],
                     preferred_element_type=jnp.float32) + bf_ref[...]
    out_ref[...] = joints.astype(out_ref.dtype)


def _choose_bm(batch):
    """Batch tile heuristic: prefer >=4 grid steps (>=2 pipelined steps per v7x
    TensorCore) with the largest MXU-friendly tile, capped at 512 rows so at real
    (IN_DIM=2048) sizes the x tile + weights comfortably fit VMEM on every generation."""
    for bm in (512, 256, 128, 64, 32, 16, 8):
        if batch % bm == 0 and batch // bm >= 4:
            return bm
    for bm in (512, 256, 128, 64, 32, 16, 8):
        if batch % bm == 0:
            return bm
    return batch


def prepare_params(params):
    """One-time parameter prep (call once, outside the per-forward path):
    weights -> bf16, biases -> f32, final projection zero-padded to a lane-dense
    (multiple-of-128) width.  Gives the constant-index BlockSpecs stable HBM buffers."""
    w0, b0, w1, b1, w2, b2, wf, bf = params
    dim, out_dim = wf.shape
    out_pad = max(128, pl.cdiv(out_dim, 128) * 128)
    wf_p = jnp.zeros((dim, out_pad), jnp.bfloat16).at[:, :out_dim].set(
        wf.astype(jnp.bfloat16))
    bf_p = jnp.zeros((1, out_pad), jnp.float32).at[:, :out_dim].set(
        bf.astype(jnp.float32))
    return (w0.astype(jnp.bfloat16), b0.astype(jnp.float32),
            w1.astype(jnp.bfloat16), b1.astype(jnp.float32),
            w2.astype(jnp.bfloat16), b2.astype(jnp.float32),
            wf_p, bf_p)


@functools.partial(jax.jit, static_argnames=("bm", "out_dim"))
def lifting_network(x, prepared_params, *, bm, out_dim=OUT_DIM):
    """Fused forward pass. x: (B, IN_DIM) f32; prepared_params from prepare_params()."""
    B, in_dim = x.shape
    w0, b0, w1, b1, w2, b2, wf_p, bf_p = prepared_params
    dim = w0.shape[1]
    out_pad = wf_p.shape[1]

    assert B % bm == 0, (B, bm)  # TODO(synk): remainder tile / masking for ragged batches

    def const_spec(shape):
        # Weights/biases: constant block index across the batch grid -> fetched once and
        # VMEM-resident.  Buffered(1) disables the (useless) double-buffering for these
        # never-changing blocks, saving ~half their VMEM footprint at real module sizes.
        return pl.BlockSpec(shape, lambda i: (0, 0), pipeline_mode=pl.Buffered(1))

    out = pl.pallas_call(
        lifting_kernel,
        out_shape=jax.ShapeDtypeStruct((B, out_pad), jnp.bfloat16),
        grid_spec=pltpu.PrefetchScalarGridSpec(
            num_scalar_prefetch=0,
            grid=(B // bm,),
            in_specs=[
                pl.BlockSpec((bm, in_dim), lambda i: (i, 0)),       # x tile (caller dtype)
                const_spec((in_dim, dim)), const_spec((1, dim)),    # linear
                const_spec((dim, dim)),    const_spec((1, dim)),    # res fc1
                const_spec((dim, dim)),    const_spec((1, dim)),    # res fc2
                const_spec((dim, out_pad)), const_spec((1, out_pad)),  # final (padded)
            ],
            out_specs=pl.BlockSpec((bm, out_pad), lambda i: (i, 0)),
        ),
        compiler_params=pltpu.CompilerParams(
            # Batch axis is embarrassingly parallel -> shards across v7x's 2 TensorCores.
            dimension_semantics=("parallel",),
            # Safe on every generation; plenty for bm<=512 even at real module sizes.
            vmem_limit_bytes=32 * 1024 * 1024,
        ),
    )(x, w0, b0, w1, b1, w2, b2, wf_p, bf_p)

    return out[:, :out_dim]


def init_params(key, in_dim=IN_DIM, dim=DIM, out_dim=OUT_DIM):
    """Deterministic synthetic init (PyTorch-style uniform fan-in bounds), f32 master copy."""
    ks = jax.random.split(key, 8)

    def lin(kw, kb, fan_in, fan_out):
        bound = 1.0 / jnp.sqrt(fan_in)
        w = jax.random.uniform(kw, (fan_in, fan_out), jnp.float32, -bound, bound)
        b = jax.random.uniform(kb, (1, fan_out), jnp.float32, -bound, bound)
        return w, b

    w0, b0 = lin(ks[0], ks[1], in_dim, dim)
    w1, b1 = lin(ks[2], ks[3], dim, dim)
    w2, b2 = lin(ks[4], ks[5], dim, dim)
    wf, bf = lin(ks[6], ks[7], dim, out_dim)
    return (w0, b0, w1, b1, w2, b2, wf, bf)


def lifting_network_ref(x, params):
    """Pure-JAX reference mirroring the PyTorch forward with the same bf16-GEMM numerics."""
    w0, b0, w1, b1, w2, b2, wf, bf = params

    def dense(a, w, b):
        return jnp.dot(a.astype(jnp.bfloat16), w.astype(jnp.bfloat16),
                       preferred_element_type=jnp.float32) + b.astype(jnp.float32)

    h = _leaky_relu(dense(x, w0, b0))
    r = _leaky_relu(dense(h, w1, b1))
    r = dense(r, w2, b2)
    h = _leaky_relu(h + r)
    return dense(h, wf, bf)


if __name__ == "__main__":
    key = jax.random.PRNGKey(0)
    kx, kp = jax.random.split(key)

    # B=512 with bm=128 -> grid (4,): MXU-shaped row tiles and >=2 pipelined steps per
    # v7x TensorCore (DMA-in / writeback hidden behind the previous step's compute).
    B = 512
    x = jax.random.normal(kx, (B, IN_DIM), jnp.float32)

    params = init_params(kp)
    kernel_params = prepare_params(params)      # one-time cast/pad, outside per-call path

    bm = _choose_bm(B)
    out = lifting_network(x, kernel_params, bm=bm)
    out = jax.block_until_ready(out)

    ref = lifting_network_ref(x, params)
    assert out.shape == (B, OUT_DIM), out.shape
    err = float(jnp.abs(out.astype(jnp.float32) - ref).max())
    assert jnp.allclose(out.astype(jnp.float32), ref, atol=2e-2, rtol=2e-2), err

    print("KERNEL_OK")
</pallas_src>

<mosaic_0001>
module attributes {stable_mosaic.version = 11 : i64} {
  func.func @lifting_kernel(%arg0: i32, %arg1: memref<128x256xf32, #tpu.memory_space<vmem>>, %arg2: memref<256x256xbf16, #tpu.memory_space<vmem>>, %arg3: memref<1x256xf32, #tpu.memory_space<vmem>>, %arg4: memref<256x256xbf16, #tpu.memory_space<vmem>>, %arg5: memref<1x256xf32, #tpu.memory_space<vmem>>, %arg6: memref<256x256xbf16, #tpu.memory_space<vmem>>, %arg7: memref<1x256xf32, #tpu.memory_space<vmem>>, %arg8: memref<256x128xbf16, #tpu.memory_space<vmem>>, %arg9: memref<1x128xf32, #tpu.memory_space<vmem>>, %arg10: memref<128x128xbf16, #tpu.memory_space<vmem>>) attributes {dimension_semantics = [#tpu.dimension_semantics<parallel>], iteration_bounds = array<i64: 4>, scalar_prefetch = 0 : i64, scratch_operands = 0 : i64, tpu.core_type = #tpu.core_type<tc>, window_params = [{transform_indices = @transform_0, window_bounds = array<i64: 128, 256>}, {pipeline_mode = #tpu.pipeline_mode<synchronous>, transform_indices = @transform_1, window_bounds = array<i64: 256, 256>}, {pipeline_mode = #tpu.pipeline_mode<synchronous>, transform_indices = @transform_2, window_bounds = array<i64: 1, 256>}, {pipeline_mode = #tpu.pipeline_mode<synchronous>, transform_indices = @transform_3, window_bounds = array<i64: 256, 256>}, {pipeline_mode = #tpu.pipeline_mode<synchronous>, transform_indices = @transform_4, window_bounds = array<i64: 1, 256>}, {pipeline_mode = #tpu.pipeline_mode<synchronous>, transform_indices = @transform_5, window_bounds = array<i64: 256, 256>}, {pipeline_mode = #tpu.pipeline_mode<synchronous>, transform_indices = @transform_6, window_bounds = array<i64: 1, 256>}, {pipeline_mode = #tpu.pipeline_mode<synchronous>, transform_indices = @transform_7, window_bounds = array<i64: 256, 128>}, {pipeline_mode = #tpu.pipeline_mode<synchronous>, transform_indices = @transform_8, window_bounds = array<i64: 1, 128>}, {transform_indices = @transform_9, window_bounds = array<i64: 128, 128>}]} {
    %c0 = arith.constant 0 : index
    %c0_0 = arith.constant 0 : index
    %0 = vector.load %arg1[%c0, %c0_0] : memref<128x256xf32, #tpu.memory_space<vmem>>, vector<128x256xf32>
    %1 = arith.truncf %0 : vector<128x256xf32> to vector<128x256xbf16>
    %c0_1 = arith.constant 0 : index
    %c0_2 = arith.constant 0 : index
    %2 = vector.load %arg2[%c0_1, %c0_2] : memref<256x256xbf16, #tpu.memory_space<vmem>>, vector<256x256xbf16>
    %cst = arith.constant dense<0.000000e+00> : vector<128x256xf32>
    %3 = tpu.matmul %1, %2, %cst {dimension_numbers = #tpu.dot_dimension_numbers<[1], [0], [0], [1], [0, 0, 1, 1], [], []>} : vector<128x256xbf16>, vector<256x256xbf16>, vector<128x256xf32> -> vector<128x256xf32>
    %c0_3 = arith.constant 0 : index
    %c0_4 = arith.constant 0 : index
    %4 = vector.load %arg3[%c0_3, %c0_4] : memref<1x256xf32, #tpu.memory_space<vmem>>, vector<1x256xf32>
    %5 = vector.broadcast %4 : vector<1x256xf32> to vector<128x256xf32>
    %6 = arith.addf %3, %5 : vector<128x256xf32>
    %cst_5 = arith.constant 0.000000e+00 : f32
    %7 = vector.broadcast %cst_5 : f32 to vector<128x256xf32>
    %8 = arith.cmpf ogt, %6, %7 : vector<128x256xf32>
    %cst_6 = arith.constant 2.000000e-01 : f32
    %9 = vector.broadcast %cst_6 : f32 to vector<128x256xf32>
    %10 = arith.mulf %9, %6 : vector<128x256xf32>
    %11 = arith.select %8, %6, %10 : vector<128x256xi1>, vector<128x256xf32>
    %12 = arith.truncf %11 : vector<128x256xf32> to vector<128x256xbf16>
    %c0_7 = arith.constant 0 : index
    %c0_8 = arith.constant 0 : index
    %13 = vector.load %arg4[%c0_7, %c0_8] : memref<256x256xbf16, #tpu.memory_space<vmem>>, vector<256x256xbf16>
    %cst_9 = arith.constant dense<0.000000e+00> : vector<128x256xf32>
    %14 = tpu.matmul %12, %13, %cst_9 {dimension_numbers = #tpu.dot_dimension_numbers<[1], [0], [0], [1], [0, 0, 1, 1], [], []>} : vector<128x256xbf16>, vector<256x256xbf16>, vector<128x256xf32> -> vector<128x256xf32>
    %c0_10 = arith.constant 0 : index
    %c0_11 = arith.constant 0 : index
    %15 = vector.load %arg5[%c0_10, %c0_11] : memref<1x256xf32, #tpu.memory_space<vmem>>, vector<1x256xf32>
    %16 = vector.broadcast %15 : vector<1x256xf32> to vector<128x256xf32>
    %17 = arith.addf %14, %16 : vector<128x256xf32>
    %cst_12 = arith.constant 0.000000e+00 : f32
    %18 = vector.broadcast %cst_12 : f32 to vector<128x256xf32>
    %19 = arith.cmpf ogt, %17, %18 : vector<128x256xf32>
    %cst_13 = arith.constant 2.000000e-01 : f32
    %20 = vector.broadcast %cst_13 : f32 to vector<128x256xf32>
    %21 = arith.mulf %20, %17 : vector<128x256xf32>
    %22 = arith.select %19, %17, %21 : vector<128x256xi1>, vector<128x256xf32>
    %23 = arith.truncf %22 : vector<128x256xf32> to vector<128x256xbf16>
    %c0_14 = arith.constant 0 : index
    %c0_15 = arith.constant 0 : index
    %24 = vector.load %arg6[%c0_14, %c0_15] : memref<256x256xbf16, #tpu.memory_space<vmem>>, vector<256x256xbf16>
    %cst_16 = arith.constant dense<0.000000e+00> : vector<128x256xf32>
    %25 = tpu.matmul %23, %24, %cst_16 {dimension_numbers = #tpu.dot_dimension_numbers<[1], [0], [0], [1], [0, 0, 1, 1], [], []>} : vector<128x256xbf16>, vector<256x256xbf16>, vector<128x256xf32> -> vector<128x256xf32>
    %c0_17 = arith.constant 0 : index
    %c0_18 = arith.constant 0 : index
    %26 = vector.load %arg7[%c0_17, %c0_18] : memref<1x256xf32, #tpu.memory_space<vmem>>, vector<1x256xf32>
    %27 = vector.broadcast %26 : vector<1x256xf32> to vector<128x256xf32>
    %28 = arith.addf %25, %27 : vector<128x256xf32>
    %29 = arith.addf %11, %28 : vector<128x256xf32>
    %cst_19 = arith.constant 0.000000e+00 : f32
    %30 = vector.broadcast %cst_19 : f32 to vector<128x256xf32>
    %31 = arith.cmpf ogt, %29, %30 : vector<128x256xf32>
    %cst_20 = arith.constant 2.000000e-01 : f32
    %32 = vector.broadcast %cst_20 : f32 to vector<128x256xf32>
    %33 = arith.mulf %32, %29 : vector<128x256xf32>
    %34 = arith.select %31, %29, %33 : vector<128x256xi1>, vector<128x256xf32>
    %35 = arith.truncf %34 : vector<128x256xf32> to vector<128x256xbf16>
    %c0_21 = arith.constant 0 : index
    %c0_22 = arith.constant 0 : index
    %36 = vector.load %arg8[%c0_21, %c0_22] : memref<256x128xbf16, #tpu.memory_space<vmem>>, vector<256x128xbf16>
    %cst_23 = arith.constant dense<0.000000e+00> : vector<128x128xf32>
    %37 = tpu.matmul %35, %36, %cst_23 {dimension_numbers = #tpu.dot_dimension_numbers<[1], [0], [0], [1], [0, 0, 1, 1], [], []>} : vector<128x256xbf16>, vector<256x128xbf16>, vector<128x128xf32> -> vector<128x128xf32>
    %c0_24 = arith.constant 0 : index
    %c0_25 = arith.constant 0 : index
    %38 = vector.load %arg9[%c0_24, %c0_25] : memref<1x128xf32, #tpu.memory_space<vmem>>, vector<1x128xf32>
    %39 = vector.broadcast %38 : vector<1x128xf32> to vector<128x128xf32>
    %40 = arith.addf %37, %39 : vector<128x128xf32>
    %41 = arith.truncf %40 : vector<128x128xf32> to vector<128x128xbf16>
    %c0_26 = arith.constant 0 : index
    %c0_27 = arith.constant 0 : index
    %42 = vector.load %arg10[%c0_26, %c0_27] : memref<128x128xbf16, #tpu.memory_space<vmem>>, vector<128x128xbf16>
    tpu.vector_store %arg10[%c0_26, %c0_27], %41 {strides = array<i32>} : memref<128x128xbf16, #tpu.memory_space<vmem>>, vector<128x128xbf16>,
    return
  }
  func.func @transform_0(%arg0: i32) -> (i32, i32) {
    %c0_i32 = arith.constant 0 : i32
    %c0_i32_0 = arith.constant 0 : i32
    return %arg0, %c0_i32 : i32, i32
  }
  func.func @transform_1(%arg0: i32) -> (i32, i32) {
    %c0_i32 = arith.constant 0 : i32
    %c0_i32_0 = arith.constant 0 : i32
    %c0_i32_1 = arith.constant 0 : i32
    return %c0_i32, %c0_i32_0 : i32, i32
  }
  func.func @transform_2(%arg0: i32) -> (i32, i32) {
    %c0_i32 = arith.constant 0 : i32
    %c0_i32_0 = arith.constant 0 : i32
    %c0_i32_1 = arith.constant 0 : i32
    return %c0_i32, %c0_i32_0 : i32, i32
  }
  func.func @transform_3(%arg0: i32) -> (i32, i32) {
    %c0_i32 = arith.constant 0 : i32
    %c0_i32_0 = arith.constant 0 : i32
    %c0_i32_1 = arith.constant 0 : i32
    return %c0_i32, %c0_i32_0 : i32, i32
  }
  func.func @transform_4(%arg0: i32) -> (i32, i32) {
    %c0_i32 = arith.constant 0 : i32
    %c0_i32_0 = arith.constant 0 : i32
    %c0_i32_1 = arith.constant 0 : i32
    return %c0_i32, %c0_i32_0 : i32, i32
  }
  func.func @transform_5(%arg0: i32) -> (i32, i32) {
    %c0_i32 = arith.constant 0 : i32
    %c0_i32_0 = arith.constant 0 : i32
    %c0_i32_1 = arith.constant 0 : i32
    return %c0_i32, %c0_i32_0 : i32, i32
  }
  func.func @transform_6(%arg0: i32) -> (i32, i32) {
    %c0_i32 = arith.constant 0 : i32
    %c0_i32_0 = arith.constant 0 : i32
    %c0_i32_1 = arith.constant 0 : i32
    return %c0_i32, %c0_i32_0 : i32, i32
  }
  func.func @transform_7(%arg0: i32) -> (i32, i32) {
    %c0_i32 = arith.constant 0 : i32
    %c0_i32_0 = arith.constant 0 : i32
    %c0_i32_1 = arith.constant 0 : i32
    return %c0_i32, %c0_i32_0 : i32, i32
  }
  func.func @transform_8(%arg0: i32) -> (i32, i32) {
    %c0_i32 = arith.constant 0 : i32
    %c0_i32_0 = arith.constant 0 : i32
    %c0_i32_1 = arith.constant 0 : i32
    return %c0_i32, %c0_i32_0 : i32, i32
  }
  func.func @transform_9(%arg0: i32) -> (i32, i32) {
    %c0_i32 = arith.constant 0 : i32
    %c0_i32_0 = arith.constant 0 : i32
    return %arg0, %c0_i32 : i32, i32
  }
}

</mosaic_0001>

<llo_original>
// kernel: lifting_network.1
$region0: #{lifting_network.1}
  #allocation0 [shape = 'u32[]', space=smem, size = 0x4, offset = 0x4, fixed_abs, tag = 'smem constant byte address 0x4 - core index']
  #allocation1 [shape = 'u32[144,128]{1,0:T(1,128)}', space=vmem, size = 0x12000, scoped, tag = 'internal scratch']
  %s0 = inlined_call_operand.hbm [shape: f32[512,256], index: 0, kind: input, shape index: {}]
  %s1 = inlined_call_operand.hbm [shape: bf16[256,256], index: 1, kind: input, shape index: {}]
  %s2 = inlined_call_operand.vmem [shape: f32[1,256], index: 2, kind: input, shape index: {}]
  %s3 = inlined_call_operand.hbm [shape: bf16[256,256], index: 3, kind: input, shape index: {}]
  %s4 = inlined_call_operand.vmem [shape: f32[1,256], index: 4, kind: input, shape index: {}]
  %s5 = inlined_call_operand.hbm [shape: bf16[256,256], index: 5, kind: input, shape index: {}]
  %s6 = inlined_call_operand.vmem [shape: f32[1,256], index: 6, kind: input, shape index: {}]
  %s7 = inlined_call_operand.hbm [shape: bf16[256,128], index: 7, kind: input, shape index: {}]
  %s8 = inlined_call_operand.vmem [shape: f32[1,128], index: 8, kind: input, shape index: {}]
  %s9 = inlined_call_operand.vmem [shape: bf16[512,128], index: 9, kind: output, shape index: {}]
  %s10 = sld [smem:[#allocation0]]
  $region89: #{lifting_network.1} parent=0
    _
  %s12 = ssub.s32 1, %s10
  %s13 = scalar_select 0, %s12, %s10
  $region1: #{lifting_network.1} parent=0
    #allocation2 [shape = 'u8[262144]{0}', space=vmem, size = 0x40000, scoped, tag = 'input window, operand 0']
    #allocation3 [shape = 's32[2]{0}', space=sflag, size = 0x8, scoped, tag = 'scoped memory for lifting_network.1']
    #allocation4 [shape = 'u8[131072]{0}', space=vmem, size = 0x20000, scoped, tag = 'input window, operand 1, single buffered']
    #allocation5 [shape = 's32[1]{0}', space=sflag, size = 0x4, scoped, tag = 'scoped memory for lifting_network.1']
    #allocation6 [shape = 'u8[131072]{0}', space=vmem, size = 0x20000, scoped, tag = 'input window, operand 3, single buffered']
    #allocation7 [shape = 'u8[131072]{0}', space=vmem, size = 0x20000, scoped, tag = 'input window, operand 5, single buffered']
    #allocation8 [shape = 's32[1]{0}', space=sflag, size = 0x4, scoped, tag = 'scoped memory for lifting_network.1']
    #allocation9 [shape = 'u8[65536]{0}', space=vmem, size = 0x10000, scoped, tag = 'input window, operand 7, single buffered']
    %14 = vsyncpa [#allocation3], 0
    %s15 = scalar_lea.sflag [#allocation3], 1
    %16 = vsyncpa %s15, 0
    %17 = vsyncpa [#allocation5], 0
    %18 = vsyncpa [#allocation8], 0
    loop: start=0, step=1, limit=6
    $region2: #{lifting_network.1} parent=1 // loop_pre_header
      _
    $region3: #{lifting_network.1} parent=1 // loop_header
      %s20 = sphi 0, %s24
      %p21 = scmp.ge.s32.totalorder %s20, 6
      %s30 = sphi 0, %s32
      %s33 = sphi 0, %s30
      %s34 = sphi 0, %s33
      %s50 = sphi 0, %s34
      %s54 = sphi 0, %s54
      %s56 = sphi 0, %s54
      %s57 = sphi 0, %s56
      %s71 = sphi 0, %s57
      %s75 = sphi 0, %s75
      %s77 = sphi 0, %s75
      %s78 = sphi 0, %s77
      %s92 = sphi 0, %s78
      %s96 = sphi 0, %s96
      %s98 = sphi 0, %s96
      %s99 = sphi 0, %s98
      %s113 = sphi 0, %s99
      %s117 = sphi 0, %s117
      %s119 = sphi 0, %s117
      %s120 = sphi 0, %s119
      %s134 = sphi 0, %s120
      %s138 = sphi 0, %s138
      %s140 = sphi 0, %s138
      %s141 = sphi 0, %s140
      %s155 = sphi 0, %s141
      %s159 = sphi 0, %s159
      %s161 = sphi 0, %s159
      %s162 = sphi 0, %s161
      %s176 = sphi 0, %s162
      %s180 = sphi 0, %s180
      %s182 = sphi 0, %s180
      %s183 = sphi 0, %s182
      %s197 = sphi 0, %s183
      %s201 = sphi 0, %s201
      %s203 = sphi 0, %s201
      %s204 = sphi 0, %s203
      %s218 = sphi 0, %s204
      %s224 = sphi 0, %s226
      %s227 = sphi 0, %s224
      %s228 = sphi 0, %s227
      %s244 = sphi 0, %s228
    $region4: #{lifting_network.1} parent=1 // loop_header_branch
      %23 = sbr.rel (%p21) target = $region8
    $region5: #{lifting_network.1} parent=1 // loop_body
      %s25 = ssub.s32 %s20, 1
      %s26 = ssub.s32 %s20, 2
      %s27 = sadd.s32 %s20, 1
      %s28 = ssub.s32 %s20, %s27
      %p29 = scmp.eq.s32.totalorder %s28, 0
      %s31 = sadd.s32 %s30, 1
      %s32 = scalar_select %p29, %s30, %s31
      %p35 = pneg %p29
      %p36 = scmp.eq.s32.totalorder %s20, 3
      %p37 = por %p35, %p36
      %p38 = scmp.ne.s32.totalorder %s30, %s33
      %p39 = scmp.eq.s32.totalorder %s20, 0
      %p40 = por %p38, %p39
      %p41 = scmp.ne.s32.totalorder %s30, %s33
      %p42 = scmp.eq.s32.totalorder %s25, 3
      %p43 = por %p41, %p42
      %p44 = scmp.ne.s32.totalorder %s33, %s34
      %p45 = scmp.eq.s32.totalorder %s25, 0
      %p46 = por %p44, %p45
      %p47 = scmp.ne.s32.totalorder %s33, %s34
      %p48 = scmp.eq.s32.totalorder %s26, 3
      %p49 = por %p47, %p48
      %p51 = scmp.ne.s32.totalorder %s34, %s50
      %p52 = scmp.eq.s32.totalorder %s26, 0
      %p53 = por %p51, %p52
      %s55 = sadd.s32 %s54, 1
      %p58 = scmp.eq.s32.totalorder %s20, 3
      %p59 = scmp.ne.s32.totalorder %s54, %s56
      %p60 = scmp.eq.s32.totalorder %s20, 0
      %p61 = por %p59, %p60
      %p62 = scmp.ne.s32.totalorder %s54, %s56
      %p63 = scmp.eq.s32.totalorder %s25, 3
      %p64 = por %p62, %p63
      %p65 = scmp.ne.s32.totalorder %s56, %s57
      %p66 = scmp.eq.s32.totalorder %s25, 0
      %p67 = por %p65, %p66
      %p68 = scmp.ne.s32.totalorder %s56, %s57
      %p69 = scmp.eq.s32.totalorder %s26, 3
      %p70 = por %p68, %p69
      %p72 = scmp.ne.s32.totalorder %s57, %s71
      %p73 = scmp.eq.s32.totalorder %s26, 0
      %p74 = por %p72, %p73
      %s76 = sadd.s32 %s75, 1
      %p79 = scmp.eq.s32.totalorder %s20, 3
      %p80 = scmp.ne.s32.totalorder %s75, %s77
      %p81 = scmp.eq.s32.totalorder %s20, 0
      %p82 = por %p80, %p81
      %p83 = scmp.ne.s32.totalorder %s75, %s77
      %p84 = scmp.eq.s32.totalorder %s25, 3
      %p85 = por %p83, %p84
      %p86 = scmp.ne.s32.totalorder %s77, %s78
      %p87 = scmp.eq.s32.totalorder %s25, 0
      %p88 = por %p86, %p87
      %p89 = scmp.ne.s32.totalorder %s77, %s78
      %p90 = scmp.eq.s32.totalorder %s26, 3
      %p91 = por %p89, %p90
      %p93 = scmp.ne.s32.totalorder %s78, %s92
      %p94 = scmp.eq.s32.totalorder %s26, 0
      %p95 = por %p93, %p94
      %s97 = sadd.s32 %s96, 1
      %p100 = scmp.eq.s32.totalorder %s20, 3
      %p101 = scmp.ne.s32.totalorder %s96, %s98
      %p102 = scmp.eq.s32.totalorder %s20, 0
      %p103 = por %p101, %p102
      %p104 = scmp.ne.s32.totalorder %s96, %s98
      %p105 = scmp.eq.s32.totalorder %s25, 3
      %p106 = por %p104, %p105
      %p107 = scmp.ne.s32.totalorder %s98, %s99
      %p108 = scmp.eq.s32.totalorder %s25, 0
      %p109 = por %p107, %p108
      %p110 = scmp.ne.s32.totalorder %s98, %s99
      %p111 = scmp.eq.s32.totalorder %s26, 3
      %p112 = por %p110, %p111
      %p114 = scmp.ne.s32.totalorder %s99, %s113
      %p115 = scmp.eq.s32.totalorder %s26, 0
      %p116 = por %p114, %p115
      %s118 = sadd.s32 %s117, 1
      %p121 = scmp.eq.s32.totalorder %s20, 3
      %p122 = scmp.ne.s32.totalorder %s117, %s119
      %p123 = scmp.eq.s32.totalorder %s20, 0
      %p124 = por %p122, %p123
      %p125 = scmp.ne.s32.totalorder %s117, %s119
      %p126 = scmp.eq.s32.totalorder %s25, 3
      %p127 = por %p125, %p126
      %p128 = scmp.ne.s32.totalorder %s119, %s120
      %p129 = scmp.eq.s32.totalorder %s25, 0
      %p130 = por %p128, %p129
      %p131 = scmp.ne.s32.totalorder %s119, %s120
      %p132 = scmp.eq.s32.totalorder %s26, 3
      %p133 = por %p131, %p132
      %p135 = scmp.ne.s32.totalorder %s120, %s134
      %p136 = scmp.eq.s32.totalorder %s26, 0
      %p137 = por %p135, %p136
      %s139 = sadd.s32 %s138, 1
      %p142 = scmp.eq.s32.totalorder %s20, 3
      %p143 = scmp.ne.s32.totalorder %s138, %s140
      %p144 = scmp.eq.s32.totalorder %s20, 0
      %p145 = por %p143, %p144
      %p146 = scmp.ne.s32.totalorder %s138, %s140
      %p147 = scmp.eq.s32.totalorder %s25, 3
      %p148 = por %p146, %p147
      %p149 = scmp.ne.s32.totalorder %s140, %s141
      %p150 = scmp.eq.s32.totalorder %s25, 0
      %p151 = por %p149, %p150
      %p152 = scmp.ne.s32.totalorder %s140, %s141
      %p153 = scmp.eq.s32.totalorder %s26, 3
      %p154 = por %p152, %p153
      %p156 = scmp.ne.s32.totalorder %s141, %s155
      %p157 = scmp.eq.s32.totalorder %s26, 0
      %p158 = por %p156, %p157
      %s160 = sadd.s32 %s159, 1
      %p163 = scmp.eq.s32.totalorder %s20, 3
      %p164 = scmp.ne.s32.totalorder %s159, %s161
      %p165 = scmp.eq.s32.totalorder %s20, 0
      %p166 = por %p164, %p165
      %p167 = scmp.ne.s32.totalorder %s159, %s161
      %p168 = scmp.eq.s32.totalorder %s25, 3
      %p169 = por %p167, %p168
      %p170 = scmp.ne.s32.totalorder %s161, %s162
      %p171 = scmp.eq.s32.totalorder %s25, 0
      %p172 = por %p170, %p171
      %p173 = scmp.ne.s32.totalorder %s161, %s162
      %p174 = scmp.eq.s32.totalorder %s26, 3
      %p175 = por %p173, %p174
      %p177 = scmp.ne.s32.totalorder %s162, %s176
      %p178 = scmp.eq.s32.totalorder %s26, 0
      %p179 = por %p177, %p178
      %s181 = sadd.s32 %s180, 1
      %p184 = scmp.eq.s32.totalorder %s20, 3
      %p185 = scmp.ne.s32.totalorder %s180, %s182
      %p186 = scmp.eq.s32.totalorder %s20, 0
      %p187 = por %p185, %p186
      %p188 = scmp.ne.s32.totalorder %s180, %s182
      %p189 = scmp.eq.s32.totalorder %s25, 3
      %p190 = por %p188, %p189
      %p191 = scmp.ne.s32.totalorder %s182, %s183
      %p192 = scmp.eq.s32.totalorder %s25, 0
      %p193 = por %p191, %p192
      %p194 = scmp.ne.s32.totalorder %s182, %s183
      %p195 = scmp.eq.s32.totalorder %s26, 3
      %p196 = por %p194, %p195
      %p198 = scmp.ne.s32.totalorder %s183, %s197
      %p199 = scmp.eq.s32.totalorder %s26, 0
      %p200 = por %p198, %p199
      %s202 = sadd.s32 %s201, 1
      %p205 = scmp.eq.s32.totalorder %s20, 3
      %p206 = scmp.ne.s32.totalorder %s201, %s203
      %p207 = scmp.eq.s32.totalorder %s20, 0
      %p208 = por %p206, %p207
      %p209 = scmp.ne.s32.totalorder %s201, %s203
      %p210 = scmp.eq.s32.totalorder %s25, 3
      %p211 = por %p209, %p210
      %p212 = scmp.ne.s32.totalorder %s203, %s204
      %p213 = scmp.eq.s32.totalorder %s25, 0
      %p214 = por %p212, %p213
      %p215 = scmp.ne.s32.totalorder %s203, %s204
      %p216 = scmp.eq.s32.totalorder %s26, 3
      %p217 = por %p215, %p216
      %p219 = scmp.ne.s32.totalorder %s204, %s218
      %p220 = scmp.eq.s32.totalorder %s26, 0
      %p221 = por %p219, %p220
      %s222 = ssub.s32 %s20, %s27
      %p223 = scmp.eq.s32.totalorder %s222, 0
      %s225 = sadd.s32 %s224, 1
      %s226 = scalar_select %p223, %s224, %s225
      %p229 = pneg %p223
      %p230 = scmp.eq.s32.totalorder %s20, 3
      %p231 = por %p229, %p230
      %p232 = scmp.ne.s32.totalorder %s224, %s227
      %p233 = scmp.eq.s32.totalorder %s20, 0
      %p234 = por %p232, %p233
      %p235 = scmp.ne.s32.totalorder %s224, %s227
      %p236 = scmp.eq.s32.totalorder %s25, 3
      %p237 = por %p235, %p236
      %p238 = scmp.ne.s32.totalorder %s227, %s228
      %p239 = scmp.eq.s32.totalorder %s25, 0
      %p240 = por %p238, %p239
      %p241 = scmp.ne.s32.totalorder %s227, %s228
      %p242 = scmp.eq.s32.totalorder %s26, 3
      %p243 = por %p241, %p242
      %p245 = scmp.ne.s32.totalorder %s228, %s244
      %p246 = scmp.eq.s32.totalorder %s26, 0
      %p247 = por %p245, %p246
      %p248 = scmp.le.s32.totalorder 1, %s20
      %p249 = scmp.lt.s32.totalorder %s20, 5
      %p250 = pnand %p248, %p249
      %p251 = pneg %p250
      // Predicated region
      $region9: #{lifting_network.1} parent=5 // pred_check
        _
      $region10: #{lifting_network.1} parent=5 // pred_check_branch
        %253 = sbr.rel (%p250) target = $region12
      $region11: #{lifting_network.1} parent=5 // pred_region
        %s254 = ssub.s32 %s20, 1
        // Predicated region
        $region13: #{lifting_network.1} parent=11 // pred_check
          %p255 = pneg %p67
        $region14: #{lifting_network.1} parent=11 // pred_check_branch
          %257 = sbr.rel (%p255) target = $region16
        $region15: #{lifting_network.1} parent=11 // pred_region
          %s259 = ssub.s32 4096, 4096
          %260 = vsyncadd [#allocation5], %s259
          %s261 = sshll.u32 [#allocation4], 4
          %s262 = int_to_ptr.vmem [resolvable:$true] %s261
          %267 = dma.hbm_to_vmem [thread:$0]  %s1, 4096, %s262, [#allocation5], 128, 128, 8
        $region16: #{lifting_network.1} parent=11 // pred_fallthru
          _
        // Predicated region
        $region17: #{lifting_network.1} parent=11 // pred_check
          %p268 = pneg %p88
        $region18: #{lifting_network.1} parent=11 // pred_check_branch
          %270 = sbr.rel (%p268) target = $region20
        $region19: #{lifting_network.1} parent=11 // pred_region
          _
        $region20: #{lifting_network.1} parent=11 // pred_fallthru
          _
        // Predicated region
        $region21: #{lifting_network.1} parent=11 // pred_check
          %p271 = pneg %p109
        $region22: #{lifting_network.1} parent=11 // pred_check_branch
          %273 = sbr.rel (%p271) target = $region24
        $region23: #{lifting_network.1} parent=11 // pred_region
          %s275 = ssub.s32 4096, 4096
          %276 = vsyncadd [#allocation5], %s275
          %s277 = sshll.u32 [#allocation6], 4
          %s278 = int_to_ptr.vmem [resolvable:$true] %s277
          %283 = dma.hbm_to_vmem [thread:$0]  %s3, 4096, %s278, [#allocation5], 128, 128, 8
        $region24: #{lifting_network.1} parent=11 // pred_fallthru
          _
        // Predicated region
        $region25: #{lifting_network.1} parent=11 // pred_check
          %p284 = pneg %p130
        $region26: #{lifting_network.1} parent=11 // pred_check_branch
          %286 = sbr.rel (%p284) target = $region28
        $region27: #{lifting_network.1} parent=11 // pred_region
          _
        $region28: #{lifting_network.1} parent=11 // pred_fallthru
          _
        // Predicated region
        $region29: #{lifting_network.1} parent=11 // pred_check
          %p287 = pneg %p151
        $region30: #{lifting_network.1} parent=11 // pred_check_branch
          %289 = sbr.rel (%p287) target = $region32
        $region31: #{lifting_network.1} parent=11 // pred_region
          %s291 = ssub.s32 4096, 4096
          %292 = vsyncadd [#allocation8], %s291
          %s293 = sshll.u32 [#allocation7], 4
          %s294 = int_to_ptr.vmem [resolvable:$true] %s293
          %299 = dma.hbm_to_vmem [thread:$0]  %s5, 4096, %s294, [#allocation8], 128, 128, 8
        $region32: #{lifting_network.1} parent=11 // pred_fallthru
          _
        // Predicated region
        $region33: #{lifting_network.1} parent=11 // pred_check
          %p300 = pneg %p172
        $region34: #{lifting_network.1} parent=11 // pred_check_branch
          %302 = sbr.rel (%p300) target = $region36
        $region35: #{lifting_network.1} parent=11 // pred_region
          _
        $region36: #{lifting_network.1} parent=11 // pred_fallthru
          _
        // Predicated region
        $region37: #{lifting_network.1} parent=11 // pred_check
          %p303 = pneg %p193
        $region38: #{lifting_network.1} parent=11 // pred_check_branch
          %305 = sbr.rel (%p303) target = $region40
        $region39: #{lifting_network.1} parent=11 // pred_region
          %s307 = ssub.s32 2048, 2048
          %308 = vsyncadd [#allocation8], %s307
          %s309 = sshll.u32 [#allocation9], 4
          %s310 = int_to_ptr.vmem [resolvable:$true] %s309
          %315 = dma.hbm_to_vmem [thread:$0]  %s7, 2048, %s310, [#allocation8], 64, 64, 4
        $region40: #{lifting_network.1} parent=11 // pred_fallthru
          _
        // Predicated region
        $region41: #{lifting_network.1} parent=11 // pred_check
          %p316 = pneg %p214
        $region42: #{lifting_network.1} parent=11 // pred_check_branch
          %318 = sbr.rel (%p316) target = $region44
        $region43: #{lifting_network.1} parent=11 // pred_region
          _
        $region44: #{lifting_network.1} parent=11 // pred_fallthru
          _
      $region12: #{lifting_network.1} parent=5 // pred_fallthru
        _
      %p319 = scmp.lt.s32.totalorder %s20, 4
      // Predicated region
      $region45: #{lifting_network.1} parent=5 // pred_check
        %p320 = pneg %p319
      $region46: #{lifting_network.1} parent=5 // pred_check_branch
        %322 = sbr.rel (%p320) target = $region48
      $region47: #{lifting_network.1} parent=5 // pred_region
        // Predicated region
        $region49: #{lifting_network.1} parent=47 // pred_check
          %p323 = pneg %p40
        $region50: #{lifting_network.1} parent=47 // pred_check_branch
          %325 = sbr.rel (%p323) target = $region52
        $region51: #{lifting_network.1} parent=47 // pred_region
          %s326 = sand.u32 %s30, 1
          %s327 = scalar_lea.sflag [#allocation3], %s326
          %s328 = sand.u32 %s30, 1
          %s329 = smul.addr %s328, 256
          %s330 = scalar_lea.vmem [#allocation2], %s329
          %s331 = smul.u32 16, %s20
          %s333 = ssub.s32 4096, 4096
          %334 = vsyncadd %s327, %s333
          %s335 = smul.addr %s331, 2
          %s336 = smul.addr %s335, 128
          %s337 = scalar_lea.hbm %s0, %s336
          %s338 = sshll.u32 %s330, 4
          %s339 = int_to_ptr.vmem [resolvable:$true] %s338
          %344 = dma.hbm_to_vmem [thread:$0]  %s337, 4096, %s339, %s327, 256, 256, 16
        $region52: #{lifting_network.1} parent=47 // pred_fallthru
          _
      $region48: #{lifting_network.1} parent=5 // pred_fallthru
        _
      %p345 = scmp.le.s32.totalorder 1, %s20
      %p346 = scmp.lt.s32.totalorder %s20, 5
      %p347 = pnand %p345, %p346
      %p348 = pneg %p347
      // Predicated region
      $region53: #{lifting_network.1} parent=5 // pred_check
        _
      $region54: #{lifting_network.1} parent=5 // pred_check_branch
        %350 = sbr.rel (%p347) target = $region56
      $region55: #{lifting_network.1} parent=5 // pred_region
        %s351 = ssub.s32 %s20, 1
        %s352 = sand.u32 %s33, 1
        %s353 = scalar_lea.sflag [#allocation3], %s352
        %s354 = sand.u32 %s33, 1
        %s355 = smul.addr %s354, 256
        %s356 = scalar_lea.vmem [#allocation2], %s355
        // Predicated region
        $region57: #{lifting_network.1} parent=55 // pred_check
          %p357 = pneg %p46
        $region58: #{lifting_network.1} parent=55 // pred_check_branch
          %359 = sbr.rel (%p357) target = $region60
        $region59: #{lifting_network.1} parent=55 // pred_region
          %360 = dma.done %s353, 4096
        $region60: #{lifting_network.1} parent=55 // pred_fallthru
          _
        // Predicated region
        $region61: #{lifting_network.1} parent=55 // pred_check
          %p361 = pneg %p67
        $region62: #{lifting_network.1} parent=55 // pred_check_branch
          %363 = sbr.rel (%p361) target = $region64
        $region63: #{lifting_network.1} parent=55 // pred_region
          %364 = dma.done [#allocation5], 4096
        $region64: #{lifting_network.1} parent=55 // pred_fallthru
          _
        // Predicated region
        $region65: #{lifting_network.1} parent=55 // pred_check
          %p365 = pneg %p109
        $region66: #{lifting_network.1} parent=55 // pred_check_branch
          %367 = sbr.rel (%p365) target = $region68
        $region67: #{lifting_network.1} parent=55 // pred_region
          %368 = dma.done [#allocation5], 4096
        $region68: #{lifting_network.1} parent=55 // pred_fallthru
          _
        // Predicated region
        $region69: #{lifting_network.1} parent=55 // pred_check
          %p369 = pneg %p151
        $region70: #{lifting_network.1} parent=55 // pred_check_branch
          %371 = sbr.rel (%p369) target = $region72
        $region71: #{lifting_network.1} parent=55 // pred_region
          %372 = dma.done [#allocation8], 4096
        $region72: #{lifting_network.1} parent=55 // pred_fallthru
          _
        // Predicated region
        $region73: #{lifting_network.1} parent=55 // pred_check
          %p373 = pneg %p193
        $region74: #{lifting_network.1} parent=55 // pred_check_branch
          %375 = sbr.rel (%p373) target = $region76
        $region75: #{lifting_network.1} parent=55 // pred_region
          %376 = dma.done [#allocation8], 2048
        $region76: #{lifting_network.1} parent=55 // pred_fallthru
          _
        %s377 = sand.u32 %s33, 1
        %s378 = scalar_lea.sflag [#allocation3], %s377
        %s379 = sand.u32 %s33, 1
        %s380 = smul.addr %s379, 256
        %s381 = scalar_lea.vmem [#allocation2], %s380
        %p382 = pneg %p46
        %p383 = pneg %p43
        %p384 = pneg %p67
        %p385 = pneg %p64
        %p386 = pneg %p88
        %p387 = pneg %p85
        %p388 = pneg %p109
        %p389 = pneg %p106
        %p390 = pneg %p130
        %p391 = pneg %p127
        %p392 = pneg %p151
        %p393 = pneg %p148
        %p394 = pneg %p172
        %p395 = pneg %p169
        %p396 = pneg %p193
        %p397 = pneg %p190
        %p398 = pneg %p214
        %p399 = pneg %p211
        %p400 = pneg %p240
        %p401 = pneg %p237
        %s402 = smul.u32 16, %s25
        %p403 = scmp.lt.s32.totalorder %s402, 63
        %s404 = scalar_select %p403, %s402, 63
        %s405 = smul.addr %s404, 4
        %s406 = scalar_lea.vmem %s9, %s405
        %s407 = smul.u32 16, %s25
        %s408 = smul.u32 16, %s25
        %p409 = scmp.lt.s32.totalorder %s408, 63
        %s410 = scalar_select %p409, %s408, 63
        %s411 = smul.addr %s410, 4
        %s412 = scalar_lea.vmem %s9, %s411
        %s413 = smul.u32 16, %s25
        %v415 = vld [vmem:[%s356] sm:$0xff]
        %v416 = vld [vmem:[%s356 + $0x8] sm:$0xff]
        %v417 = vld [vmem:[%s356 + $0x10] sm:$0xff]
        %v418 = vld [vmem:[%s356 + $0x18] sm:$0xff]
        %v419 = vld [vmem:[%s356 + $0x20] sm:$0xff]
        %v420 = vld [vmem:[%s356 + $0x28] sm:$0xff]
        %v421 = vld [vmem:[%s356 + $0x30] sm:$0xff]
        %v422 = vld [vmem:[%s356 + $0x38] sm:$0xff]
        %v423 = vld [vmem:[%s356 + $0x40] sm:$0xff]
        %v424 = vld [vmem:[%s356 + $0x48] sm:$0xff]
        %v425 = vld [vmem:[%s356 + $0x50] sm:$0xff]
        %v426 = vld [vmem:[%s356 + $0x58] sm:$0xff]
        %v427 = vld [vmem:[%s356 + $0x60] sm:$0xff]
        %v428 = vld [vmem:[%s356 + $0x68] sm:$0xff]
        %v429 = vld [vmem:[%s356 + $0x70] sm:$0xff]
        %v430 = vld [vmem:[%s356 + $0x78] sm:$0xff]
        %v431 = vld [vmem:[%s356 + $0x80] sm:$0xff]
        %v432 = vld [vmem:[%s356 + $0x88] sm:$0xff]
        %v433 = vld [vmem:[%s356 + $0x90] sm:$0xff]
        %v434 = vld [vmem:[%s356 + $0x98] sm:$0xff]
        %v435 = vld [vmem:[%s356 + $0xa0] sm:$0xff]
        %v436 = vld [vmem:[%s356 + $0xa8] sm:$0xff]
        %v437 = vld [vmem:[%s356 + $0xb0] sm:$0xff]
        %v438 = vld [vmem:[%s356 + $0xb8] sm:$0xff]
        %v439 = vld [vmem:[%s356 + $0xc0] sm:$0xff]
        %v440 = vld [vmem:[%s356 + $0xc8] sm:$0xff]
        %v441 = vld [vmem:[%s356 + $0xd0] sm:$0xff]
        %v442 = vld [vmem:[%s356 + $0xd8] sm:$0xff]
        %v443 = vld [vmem:[%s356 + $0xe0] sm:$0xff]
        %v444 = vld [vmem:[%s356 + $0xe8] sm:$0xff]
        %v445 = vld [vmem:[%s356 + $0xf0] sm:$0xff]
        %v446 = vld [vmem:[%s356 + $0xf8] sm:$0xff]
        %v447 = vpack.c.bf16 %v417, %v415
        %v448 = vpack.c.bf16 %v418, %v416
        %v449 = vpack.c.bf16 %v421, %v419
        %v450 = vpack.c.bf16 %v422, %v420
        %v451 = vpack.c.bf16 %v425, %v423
        %v452 = vpack.c.bf16 %v426, %v424
        %v453 = vpack.c.bf16 %v429, %v427
        %v454 = vpack.c.bf16 %v430, %v428
        %v455 = vpack.c.bf16 %v433, %v431
        %v456 = vpack.c.bf16 %v434, %v432
        %v457 = vpack.c.bf16 %v437, %v435
        %v458 = vpack.c.bf16 %v438, %v436
        %v459 = vpack.c.bf16 %v441, %v439
        %v460 = vpack.c.bf16 %v442, %v440
        %v461 = vpack.c.bf16 %v445, %v443
        %v462 = vpack.c.bf16 %v446, %v444
        %v463 = vld [vmem:[#allocation4] sm:$0xff]
        %v464 = vld [vmem:[#allocation4 + $0x8] sm:$0xff]
        %v465 = vld [vmem:[#allocation4 + $0x10] sm:$0xff]
        %v466 = vld [vmem:[#allocation4 + $0x18] sm:$0xff]
        %v467 = vld [vmem:[#allocation4 + $0x20] sm:$0xff]
        %v468 = vld [vmem:[#allocation4 + $0x28] sm:$0xff]
        %v469 = vld [vmem:[#allocation4 + $0x30] sm:$0xff]
        %v470 = vld [vmem:[#allocation4 + $0x38] sm:$0xff]
        %v471 = vld [vmem:[#allocation4 + $0x40] sm:$0xff]
        %v472 = vld [vmem:[#allocation4 + $0x48] sm:$0xff]
        %v473 = vld [vmem:[#allocation4 + $0x50] sm:$0xff]
        %v474 = vld [vmem:[#allocation4 + $0x58] sm:$0xff]
        %v475 = vld [vmem:[#allocation4 + $0x60] sm:$0xff]
        %v476 = vld [vmem:[#allocation4 + $0x68] sm:$0xff]
        %v477 = vld [vmem:[#allocation4 + $0x70] sm:$0xff]
        %v478 = vld [vmem:[#allocation4 + $0x78] sm:$0xff]
        %v479 = vld [vmem:[#allocation4 + $0x80] sm:$0xff]
        %v480 = vld [vmem:[#allocation4 + $0x88] sm:$0xff]
        %v481 = vld [vmem:[#allocation4 + $0x90] sm:$0xff]
        %v482 = vld [vmem:[#allocation4 + $0x98] sm:$0xff]
        %v483 = vld [vmem:[#allocation4 + $0xa0] sm:$0xff]
        %v484 = vld [vmem:[#allocation4 + $0xa8] sm:$0xff]
        %v485 = vld [vmem:[#allocation4 + $0xb0] sm:$0xff]
        %v486 = vld [vmem:[#allocation4 + $0xb8] sm:$0xff]
        %v487 = vld [vmem:[#allocation4 + $0xc0] sm:$0xff]
        %v488 = vld [vmem:[#allocation4 + $0xc8] sm:$0xff]
        %v489 = vld [vmem:[#allocation4 + $0xd0] sm:$0xff]
        %v490 = vld [vmem:[#allocation4 + $0xd8] sm:$0xff]
        %v491 = vld [vmem:[#allocation4 + $0xe0] sm:$0xff]
        %v492 = vld [vmem:[#allocation4 + $0xe8] sm:$0xff]
        %v493 = vld [vmem:[#allocation4 + $0xf0] sm:$0xff]
        %v494 = vld [vmem:[#allocation4 + $0xf8] sm:$0xff]
        %v495 = vld [vmem:[%s2] sm:$0x3]
        %v497 = vlaneseq
        %v498 = vshrl.u32 %v497, 7
        %v499 = vsub.s32 0, %v498
        %v500 = vrot.slane %v495, %v499
        %v501 = vlaneseq
        %v502 = vshrl.u32 %v501, 7
        %v503 = vsub.s32 1, %v502
        %v504 = vrot.slane %v495, %v503
        %v539 = vunpack.c.l.b16 %v463
        %v540 = vunpack.c.h.b16 %v463
        %v541 = vunpack.c.l.b16 %v464
        %v542 = vunpack.c.h.b16 %v464
        %v543 = vunpack.c.l.b16 %v465
        %v544 = vunpack.c.h.b16 %v465
        %v545 = vunpack.c.l.b16 %v466
        %v546 = vunpack.c.h.b16 %v466
        %v547 = vunpack.c.l.b16 %v467
        %v548 = vunpack.c.h.b16 %v467
        %v549 = vunpack.c.l.b16 %v468
        %v550 = vunpack.c.h.b16 %v468
        %v551 = vunpack.c.l.b16 %v469
        %v552 = vunpack.c.h.b16 %v469
        %v553 = vunpack.c.l.b16 %v470
        %v554 = vunpack.c.h.b16 %v470
        %v555 = vunpack.c.l.b16 %v471
        %v556 = vunpack.c.h.b16 %v471
        %v557 = vunpack.c.l.b16 %v472
        %v558 = vunpack.c.h.b16 %v472
        %v559 = vunpack.c.l.b16 %v473
        %v560 = vunpack.c.h.b16 %v473
        %v561 = vunpack.c.l.b16 %v474
        %v562 = vunpack.c.h.b16 %v474
        %v563 = vunpack.c.l.b16 %v475
        %v564 = vunpack.c.h.b16 %v475
        %v565 = vunpack.c.l.b16 %v476
        %v566 = vunpack.c.h.b16 %v476
        %v567 = vunpack.c.l.b16 %v477
        %v568 = vunpack.c.h.b16 %v477
        %v569 = vunpack.c.l.b16 %v478
        %v570 = vunpack.c.h.b16 %v478
        %v571 = vunpack.c.l.b16 %v479
        %v572 = vunpack.c.h.b16 %v479
        %v573 = vunpack.c.l.b16 %v480
        %v574 = vunpack.c.h.b16 %v480
        %v575 = vunpack.c.l.b16 %v481
        %v576 = vunpack.c.h.b16 %v481
        %v577 = vunpack.c.l.b16 %v482
        %v578 = vunpack.c.h.b16 %v482
        %v579 = vunpack.c.l.b16 %v483
        %v580 = vunpack.c.h.b16 %v483
        %v581 = vunpack.c.l.b16 %v484
        %v582 = vunpack.c.h.b16 %v484
        %v583 = vunpack.c.l.b16 %v485
        %v584 = vunpack.c.h.b16 %v485
        %v585 = vunpack.c.l.b16 %v486
        %v586 = vunpack.c.h.b16 %v486
        %v587 = vunpack.c.l.b16 %v487
        %v588 = vunpack.c.h.b16 %v487
        %v589 = vunpack.c.l.b16 %v488
        %v590 = vunpack.c.h.b16 %v488
        %v591 = vunpack.c.l.b16 %v489
        %v592 = vunpack.c.h.b16 %v489
        %v593 = vunpack.c.l.b16 %v490
        %v594 = vunpack.c.h.b16 %v490
        %v595 = vunpack.c.l.b16 %v491
        %v596 = vunpack.c.h.b16 %v491
        %v597 = vunpack.c.l.b16 %v492
        %v598 = vunpack.c.h.b16 %v492
        %v599 = vunpack.c.l.b16 %v493
        %v600 = vunpack.c.h.b16 %v493
        %v601 = vunpack.c.l.b16 %v494
        %v602 = vunpack.c.h.b16 %v494
        %v603 = vpack.c.b16 %v541, %v539
        %v604 = vpack.c.b16 %v542, %v540
        %v605 = vpack.c.b16 %v545, %v543
        %v606 = vpack.c.b16 %v546, %v544
        %v607 = vpack.c.b16 %v549, %v547
        %v608 = vpack.c.b16 %v550, %v548
        %v609 = vpack.c.b16 %v553, %v551
        %v610 = vpack.c.b16 %v554, %v552
        %v611 = vpack.c.b16 %v557, %v555
        %v612 = vpack.c.b16 %v558, %v556
        %v613 = vpack.c.b16 %v561, %v559
        %v614 = vpack.c.b16 %v562, %v560
        %v615 = vpack.c.b16 %v565, %v563
        %v616 = vpack.c.b16 %v566, %v564
        %v617 = vpack.c.b16 %v569, %v567
        %v618 = vpack.c.b16 %v570, %v568
        %v619 = vpack.c.b16 %v573, %v571
        %v620 = vpack.c.b16 %v574, %v572
        %v621 = vpack.c.b16 %v577, %v575
        %v622 = vpack.c.b16 %v578, %v576
        %v623 = vpack.c.b16 %v581, %v579
        %v624 = vpack.c.b16 %v582, %v580
        %v625 = vpack.c.b16 %v585, %v583
        %v626 = vpack.c.b16 %v586, %v584
        %v627 = vpack.c.b16 %v589, %v587
        %v628 = vpack.c.b16 %v590, %v588
        %v629 = vpack.c.b16 %v593, %v591
        %v630 = vpack.c.b16 %v594, %v592
        %v631 = vpack.c.b16 %v597, %v595
        %v632 = vpack.c.b16 %v598, %v596
        %v633 = vpack.c.b16 %v601, %v599
        %v634 = vpack.c.b16 %v602, %v600
        %667 = vmatprep.subr.bf16.mxu0 %v618
        %668 = vmatpush1.bf16.msra.mxu0 %v617
        %669 = vmatprep.subr.bf16.mxu0 %v616
        %670 = vmatpush1.bf16.msra.mxu0 %v615
        %671 = vmatprep.subr.bf16.mxu0 %v614
        %672 = vmatpush1.bf16.msra.mxu0 %v613
        %673 = vmatprep.subr.bf16.mxu0 %v612
        %674 = vmatpush1.bf16.msra.mxu0 %v611
        %675 = vmatprep.subr.bf16.mxu0 %v610
        %676 = vmatpush1.bf16.msra.mxu0 %v609
        %677 = vmatprep.subr.bf16.mxu0 %v608
        %678 = vmatpush1.bf16.msra.mxu0 %v607
        %679 = vmatprep.subr.bf16.mxu0 %v606
        %680 = vmatpush1.bf16.msra.mxu0 %v605
        %681 = vmatprep.subr.bf16.mxu0 %v604
        %682 = vmatpush1.bf16.msra.mxu0 %v603
        %683 = vmatprep.subr.bf16.mxu0 %v634
        %684 = vmatpush2.bf16.msra.mxu0 %v633
        %685 = vmatprep.subr.bf16.mxu0 %v632
        %686 = vmatpush2.bf16.msra.mxu0 %v631
        %687 = vmatprep.subr.bf16.mxu0 %v630
        %688 = vmatpush2.bf16.msra.mxu0 %v629
        %689 = vmatprep.subr.bf16.mxu0 %v628
        %690 = vmatpush2.bf16.msra.mxu0 %v627
        %691 = vmatprep.subr.bf16.mxu0 %v626
        %692 = vmatpush2.bf16.msra.mxu0 %v625
        %693 = vmatprep.subr.bf16.mxu0 %v624
        %694 = vmatpush2.bf16.msra.mxu0 %v623
        %695 = vmatprep.subr.bf16.mxu0 %v622
        %696 = vmatpush2.bf16.msra.mxu0 %v621
        %697 = vmatprep.subr.bf16.mxu0 %v620
        %698 = vmatpush2.bf16.msra.mxu0 %v619
        %699 = vmatprep.mubr.bf16.mxu0 %v448
        %700 = vmatmul.mubr.bf16.gmra.mxu0 %v447
        %v701 = vpop.f32.mrf.mxu0
        %v702 = vadd.f32 %v500, %v701
        %v703 = vpop.f32.mrf.mxu0
        %v704 = vadd.f32 %v504, %v703
        %v705 = vpop.f32.mrf.mxu0
        %v706 = vadd.f32 %v500, %v705
        %v707 = vpop.f32.mrf.mxu0
        %v708 = vadd.f32 %v504, %v707
        %709 = vmatprep.mubr.bf16.mxu0 %v450
        %710 = vmatmul.mubr.bf16.gmra.mxu0 %v449
        %v711 = vpop.f32.mrf.mxu0
        %v712 = vadd.f32 %v500, %v711
        %v713 = vpop.f32.mrf.mxu0
        %v714 = vadd.f32 %v504, %v713
        %v715 = vpop.f32.mrf.mxu0
        %v716 = vadd.f32 %v500, %v715
        %v717 = vpop.f32.mrf.mxu0
        %v718 = vadd.f32 %v504, %v717
        %719 = vmatprep.mubr.bf16.mxu0 %v452
        %720 = vmatmul.mubr.bf16.gmra.mxu0 %v451
        %v721 = vpop.f32.mrf.mxu0
        %v722 = vadd.f32 %v500, %v721
        %v723 = vpop.f32.mrf.mxu0
        %v724 = vadd.f32 %v504, %v723
        %v725 = vpop.f32.mrf.mxu0
        %v726 = vadd.f32 %v500, %v725
        %v727 = vpop.f32.mrf.mxu0
        %v728 = vadd.f32 %v504, %v727
        %729 = vmatprep.mubr.bf16.mxu0 %v454
        %730 = vmatmul.mubr.bf16.gmra.mxu0 %v453
        %v731 = vpop.f32.mrf.mxu0
        %v732 = vadd.f32 %v500, %v731
        %v733 = vpop.f32.mrf.mxu0
        %v734 = vadd.f32 %v504, %v733
        %v735 = vpop.f32.mrf.mxu0
        %v736 = vadd.f32 %v500, %v735
        %v737 = vpop.f32.mrf.mxu0
        %v738 = vadd.f32 %v504, %v737
        %739 = vmatprep.mubr.bf16.mxu0 %v456
        %740 = vmatmul.mubr.bf16.gmra.mxu0 %v455
        %v741 = vpop.f32.mrf.mxu0
        %v742 = vadd.f32 %v500, %v741
        %v743 = vpop.f32.mrf.mxu0
        %v744 = vadd.f32 %v504, %v743
        %v745 = vpop.f32.mrf.mxu0
        %v746 = vadd.f32 %v500, %v745
        %v747 = vpop.f32.mrf.mxu0
        %v748 = vadd.f32 %v504, %v747
        %749 = vmatprep.mubr.bf16.mxu0 %v458
        %750 = vmatmul.mubr.bf16.gmra.mxu0 %v457
        %v751 = vpop.f32.mrf.mxu0
        %v752 = vadd.f32 %v500, %v751
        %v753 = vpop.f32.mrf.mxu0
        %v754 = vadd.f32 %v504, %v753
        %v755 = vpop.f32.mrf.mxu0
        %v756 = vadd.f32 %v500, %v755
        %v757 = vpop.f32.mrf.mxu0
        %v758 = vadd.f32 %v504, %v757
        %759 = vmatprep.mubr.bf16.mxu0 %v460
        %760 = vmatmul.mubr.bf16.gmra.mxu0 %v459
        %v761 = vpop.f32.mrf.mxu0
        %v762 = vadd.f32 %v500, %v761
        %v763 = vpop.f32.mrf.mxu0
        %v764 = vadd.f32 %v504, %v763
        %v765 = vpop.f32.mrf.mxu0
        %v766 = vadd.f32 %v500, %v765
        %v767 = vpop.f32.mrf.mxu0
        %v768 = vadd.f32 %v504, %v767
        %769 = vmatprep.mubr.bf16.mxu0 %v462
        %770 = vmatmul.mubr.bf16.gmra.mxu0 %v461
        %v771 = vpop.f32.mrf.mxu0
        %v772 = vadd.f32 %v500, %v771
        %v773 = vpop.f32.mrf.mxu0
        %v774 = vadd.f32 %v504, %v773
        %v775 = vpop.f32.mrf.mxu0
        %v776 = vadd.f32 %v500, %v775
        %v777 = vpop.f32.mrf.mxu0
        %v778 = vadd.f32 %v504, %v777
        %779 = vdwg.mxu0
        %vm780 = vcmp.gt.f32.partialorder %v702, 0.0
        %vm781 = vcmp.gt.f32.partialorder %v704, 0.0
        %vm782 = vcmp.gt.f32.partialorder %v706, 0.0
        %vm783 = vcmp.gt.f32.partialorder %v708, 0.0
        %vm784 = vcmp.gt.f32.partialorder %v712, 0.0
        %vm785 = vcmp.gt.f32.partialorder %v714, 0.0
        %vm786 = vcmp.gt.f32.partialorder %v716, 0.0
        %vm787 = vcmp.gt.f32.partialorder %v718, 0.0
        %vm788 = vcmp.gt.f32.partialorder %v722, 0.0
        %vm789 = vcmp.gt.f32.partialorder %v724, 0.0
        %vm790 = vcmp.gt.f32.partialorder %v726, 0.0
        %vm791 = vcmp.gt.f32.partialorder %v728, 0.0
        %vm792 = vcmp.gt.f32.partialorder %v732, 0.0
        %vm793 = vcmp.gt.f32.partialorder %v734, 0.0
        %vm794 = vcmp.gt.f32.partialorder %v736, 0.0
        %vm795 = vcmp.gt.f32.partialorder %v738, 0.0
        %vm796 = vcmp.gt.f32.partialorder %v742, 0.0
        %vm797 = vcmp.gt.f32.partialorder %v744, 0.0
        %vm798 = vcmp.gt.f32.partialorder %v746, 0.0
        %vm799 = vcmp.gt.f32.partialorder %v748, 0.0
        %vm800 = vcmp.gt.f32.partialorder %v752, 0.0
        %vm801 = vcmp.gt.f32.partialorder %v754, 0.0
        %vm802 = vcmp.gt.f32.partialorder %v756, 0.0
        %vm803 = vcmp.gt.f32.partialorder %v758, 0.0
        %vm804 = vcmp.gt.f32.partialorder %v762, 0.0
        %vm805 = vcmp.gt.f32.partialorder %v764, 0.0
        %vm806 = vcmp.gt.f32.partialorder %v766, 0.0
        %vm807 = vcmp.gt.f32.partialorder %v768, 0.0
        %vm808 = vcmp.gt.f32.partialorder %v772, 0.0
        %vm809 = vcmp.gt.f32.partialorder %v774, 0.0
        %vm810 = vcmp.gt.f32.partialorder %v776, 0.0
        %vm811 = vcmp.gt.f32.partialorder %v778, 0.0
        %v812 = vmul.f32 %v702, 0.2
        %v813 = vmul.f32 %v704, 0.2
        %v814 = vmul.f32 %v706, 0.2
        %v815 = vmul.f32 %v708, 0.2
        %v816 = vmul.f32 %v712, 0.2
        %v817 = vmul.f32 %v714, 0.2
        %v818 = vmul.f32 %v716, 0.2
        %v819 = vmul.f32 %v718, 0.2
        %v820 = vmul.f32 %v722, 0.2
        %v821 = vmul.f32 %v724, 0.2
        %v822 = vmul.f32 %v726, 0.2
        %v823 = vmul.f32 %v728, 0.2
        %v824 = vmul.f32 %v732, 0.2
        %v825 = vmul.f32 %v734, 0.2
        %v826 = vmul.f32 %v736, 0.2
        %v827 = vmul.f32 %v738, 0.2
        %v828 = vmul.f32 %v742, 0.2
        %v829 = vmul.f32 %v744, 0.2
        %v830 = vmul.f32 %v746, 0.2
        %v831 = vmul.f32 %v748, 0.2
        %v832 = vmul.f32 %v752, 0.2
        %v833 = vmul.f32 %v754, 0.2
        %v834 = vmul.f32 %v756, 0.2
        %v835 = vmul.f32 %v758, 0.2
        %v836 = vmul.f32 %v762, 0.2
        %v837 = vmul.f32 %v764, 0.2
        %v838 = vmul.f32 %v766, 0.2
        %v839 = vmul.f32 %v768, 0.2
        %v840 = vmul.f32 %v772, 0.2
        %v841 = vmul.f32 %v774, 0.2
        %v842 = vmul.f32 %v776, 0.2
        %v843 = vmul.f32 %v778, 0.2
        %v844 = vsel %vm780, %v702, %v812
        %v845 = vsel %vm781, %v704, %v813
        %v846 = vsel %vm782, %v706, %v814
        %v847 = vsel %vm783, %v708, %v815
        %v848 = vsel %vm784, %v712, %v816
        %v849 = vsel %vm785, %v714, %v817
        %v850 = vsel %vm786, %v716, %v818
        %v851 = vsel %vm787, %v718, %v819
        %v852 = vsel %vm788, %v722, %v820
        %v853 = vsel %vm789, %v724, %v821
        %v854 = vsel %vm790, %v726, %v822
        %v855 = vsel %vm791, %v728, %v823
        %v856 = vsel %vm792, %v732, %v824
        %v857 = vsel %vm793, %v734, %v825
        %v858 = vsel %vm794, %v736, %v826
        %v859 = vsel %vm795, %v738, %v827
        %v860 = vsel %vm796, %v742, %v828
        %v861 = vsel %vm797, %v744, %v829
        %v862 = vsel %vm798, %v746, %v830
        %v863 = vsel %vm799, %v748, %v831
        %v864 = vsel %vm800, %v752, %v832
        %v865 = vsel %vm801, %v754, %v833
        %v866 = vsel %vm802, %v756, %v834
        %v867 = vsel %vm803, %v758, %v835
        %v868 = vsel %vm804, %v762, %v836
        %v869 = vsel %vm805, %v764, %v837
        %v870 = vsel %vm806, %v766, %v838
        %v871 = vsel %vm807, %v768, %v839
        %v872 = vsel %vm808, %v772, %v840
        %v873 = vsel %vm809, %v774, %v841
        %v874 = vsel %vm810, %v776, %v842
        %v875 = vsel %vm811, %v778, %v843
        %v876 = vpack.c.bf16 %v846, %v844
        %v877 = vpack.c.bf16 %v847, %v845
        %v878 = vpack.c.bf16 %v850, %v848
        %v879 = vpack.c.bf16 %v851, %v849
        %v880 = vpack.c.bf16 %v854, %v852
        %v881 = vpack.c.bf16 %v855, %v853
        %v882 = vpack.c.bf16 %v858, %v856
        %v883 = vpack.c.bf16 %v859, %v857
        %v884 = vpack.c.bf16 %v862, %v860
        %v885 = vpack.c.bf16 %v863, %v861
        %v886 = vpack.c.bf16 %v866, %v864
        %v887 = vpack.c.bf16 %v867, %v865
        %v888 = vpack.c.bf16 %v870, %v868
        %v889 = vpack.c.bf16 %v871, %v869
        %v890 = vpack.c.bf16 %v874, %v872
        %v891 = vpack.c.bf16 %v875, %v873
        %v892 = vld [vmem:[#allocation6] sm:$0xff]
        %v893 = vld [vmem:[#allocation6 + $0x8] sm:$0xff]
        %v894 = vld [vmem:[#allocation6 + $0x10] sm:$0xff]
        %v895 = vld [vmem:[#allocation6 + $0x18] sm:$0xff]
        %v896 = vld [vmem:[#allocation6 + $0x20] sm:$0xff]
        %v897 = vld [vmem:[#allocation6 + $0x28] sm:$0xff]
        %v898 = vld [vmem:[#allocation6 + $0x30] sm:$0xff]
        %v899 = vld [vmem:[#allocation6 + $0x38] sm:$0xff]
        %v900 = vld [vmem:[#allocation6 + $0x40] sm:$0xff]
        %v901 = vld [vmem:[#allocation6 + $0x48] sm:$0xff]
        %v902 = vld [vmem:[#allocation6 + $0x50] sm:$0xff]
        %v903 = vld [vmem:[#allocation6 + $0x58] sm:$0xff]
        %v904 = vld [vmem:[#allocation6 + $0x60] sm:$0xff]
        %v905 = vld [vmem:[#allocation6 + $0x68] sm:$0xff]
        %v906 = vld [vmem:[#allocation6 + $0x70] sm:$0xff]
        %v907 = vld [vmem:[#allocation6 + $0x78] sm:$0xff]
        %v908 = vld [vmem:[#allocation6 + $0x80] sm:$0xff]
        %v909 = vld [vmem:[#allocation6 + $0x88] sm:$0xff]
        %v910 = vld [vmem:[#allocation6 + $0x90] sm:$0xff]
        %v911 = vld [vmem:[#allocation6 + $0x98] sm:$0xff]
        %v912 = vld [vmem:[#allocation6 + $0xa0] sm:$0xff]
        %v913 = vld [vmem:[#allocation6 + $0xa8] sm:$0xff]
        %v914 = vld [vmem:[#allocation6 + $0xb0] sm:$0xff]
        %v915 = vld [vmem:[#allocation6 + $0xb8] sm:$0xff]
        %v916 = vld [vmem:[#allocation6 + $0xc0] sm:$0xff]
        %v917 = vld [vmem:[#allocation6 + $0xc8] sm:$0xff]
        %v918 = vld [vmem:[#allocation6 + $0xd0] sm:$0xff]
        %v919 = vld [vmem:[#allocation6 + $0xd8] sm:$0xff]
        %v920 = vld [vmem:[#allocation6 + $0xe0] sm:$0xff]
        %v921 = vld [vmem:[#allocation6 + $0xe8] sm:$0xff]
        %v922 = vld [vmem:[#allocation6 + $0xf0] sm:$0xff]
        %v923 = vld [vmem:[#allocation6 + $0xf8] sm:$0xff]
        %v924 = vld [vmem:[%s4] sm:$0x3]
        %v926 = vlaneseq
        %v927 = vshrl.u32 %v926, 7
        %v928 = vsub.s32 0, %v927
        %v929 = vrot.slane %v924, %v928
        %v930 = vlaneseq
        %v931 = vshrl.u32 %v930, 7
        %v932 = vsub.s32 1, %v931
        %v933 = vrot.slane %v924, %v932
        %v968 = vunpack.c.l.b16 %v892
        %v969 = vunpack.c.h.b16 %v892
        %v970 = vunpack.c.l.b16 %v893
        %v971 = vunpack.c.h.b16 %v893
        %v972 = vunpack.c.l.b16 %v894
        %v973 = vunpack.c.h.b16 %v894
        %v974 = vunpack.c.l.b16 %v895
        %v975 = vunpack.c.h.b16 %v895
        %v976 = vunpack.c.l.b16 %v896
        %v977 = vunpack.c.h.b16 %v896
        %v978 = vunpack.c.l.b16 %v897
        %v979 = vunpack.c.h.b16 %v897
        %v980 = vunpack.c.l.b16 %v898
        %v981 = vunpack.c.h.b16 %v898
        %v982 = vunpack.c.l.b16 %v899
        %v983 = vunpack.c.h.b16 %v899
        %v984 = vunpack.c.l.b16 %v900
        %v985 = vunpack.c.h.b16 %v900
        %v986 = vunpack.c.l.b16 %v901
        %v987 = vunpack.c.h.b16 %v901
        %v988 = vunpack.c.l.b16 %v902
        %v989 = vunpack.c.h.b16 %v902
        %v990 = vunpack.c.l.b16 %v903
        %v991 = vunpack.c.h.b16 %v903
        %v992 = vunpack.c.l.b16 %v904
        %v993 = vunpack.c.h.b16 %v904
        %v994 = vunpack.c.l.b16 %v905
        %v995 = vunpack.c.h.b16 %v905
        %v996 = vunpack.c.l.b16 %v906
        %v997 = vunpack.c.h.b16 %v906
        %v998 = vunpack.c.l.b16 %v907
        %v999 = vunpack.c.h.b16 %v907
        %v1000 = vunpack.c.l.b16 %v908
        %v1001 = vunpack.c.h.b16 %v908
        %v1002 = vunpack.c.l.b16 %v909
        %v1003 = vunpack.c.h.b16 %v909
        %v1004 = vunpack.c.l.b16 %v910
        %v1005 = vunpack.c.h.b16 %v910
        %v1006 = vunpack.c.l.b16 %v911
        %v1007 = vunpack.c.h.b16 %v911
        %v1008 = vunpack.c.l.b16 %v912
        %v1009 = vunpack.c.h.b16 %v912
        %v1010 = vunpack.c.l.b16 %v913
        %v1011 = vunpack.c.h.b16 %v913
        %v1012 = vunpack.c.l.b16 %v914
        %v1013 = vunpack.c.h.b16 %v914
        %v1014 = vunpack.c.l.b16 %v915
        %v1015 = vunpack.c.h.b16 %v915
        %v1016 = vunpack.c.l.b16 %v916
        %v1017 = vunpack.c.h.b16 %v916
        %v1018 = vunpack.c.l.b16 %v917
        %v1019 = vunpack.c.h.b16 %v917
        %v1020 = vunpack.c.l.b16 %v918
        %v1021 = vunpack.c.h.b16 %v918
        %v1022 = vunpack.c.l.b16 %v919
        %v1023 = vunpack.c.h.b16 %v919
        %v1024 = vunpack.c.l.b16 %v920
        %v1025 = vunpack.c.h.b16 %v920
        %v1026 = vunpack.c.l.b16 %v921
        %v1027 = vunpack.c.h.b16 %v921
        %v1028 = vunpack.c.l.b16 %v922
        %v1029 = vunpack.c.h.b16 %v922
        %v1030 = vunpack.c.l.b16 %v923
        %v1031 = vunpack.c.h.b16 %v923
        %v1032 = vpack.c.b16 %v970, %v968
        %v1033 = vpack.c.b16 %v971, %v969
        %v1034 = vpack.c.b16 %v974, %v972
        %v1035 = vpack.c.b16 %v975, %v973
        %v1036 = vpack.c.b16 %v978, %v976
        %v1037 = vpack.c.b16 %v979, %v977
        %v1038 = vpack.c.b16 %v982, %v980
        %v1039 = vpack.c.b16 %v983, %v981
        %v1040 = vpack.c.b16 %v986, %v984
        %v1041 = vpack.c.b16 %v987, %v985
        %v1042 = vpack.c.b16 %v990, %v988
        %v1043 = vpack.c.b16 %v991, %v989
        %v1044 = vpack.c.b16 %v994, %v992
        %v1045 = vpack.c.b16 %v995, %v993
        %v1046 = vpack.c.b16 %v998, %v996
        %v1047 = vpack.c.b16 %v999, %v997
        %v1048 = vpack.c.b16 %v1002, %v1000
        %v1049 = vpack.c.b16 %v1003, %v1001
        %v1050 = vpack.c.b16 %v1006, %v1004
        %v1051 = vpack.c.b16 %v1007, %v1005
        %v1052 = vpack.c.b16 %v1010, %v1008
        %v1053 = vpack.c.b16 %v1011, %v1009
        %v1054 = vpack.c.b16 %v1014, %v1012
        %v1055 = vpack.c.b16 %v1015, %v1013
        %v1056 = vpack.c.b16 %v1018, %v1016
        %v1057 = vpack.c.b16 %v1019, %v1017
        %v1058 = vpack.c.b16 %v1022, %v1020
        %v1059 = vpack.c.b16 %v1023, %v1021
        %v1060 = vpack.c.b16 %v1026, %v1024
        %v1061 = vpack.c.b16 %v1027, %v1025
        %v1062 = vpack.c.b16 %v1030, %v1028
        %v1063 = vpack.c.b16 %v1031, %v1029
        %1096 = vmatprep.subr.bf16.mxu0 %v1047
        %1097 = vmatpush1.bf16.msra.mxu0 %v1046
        %1098 = vmatprep.subr.bf16.mxu0 %v1045
        %1099 = vmatpush1.bf16.msra.mxu0 %v1044
        %1100 = vmatprep.subr.bf16.mxu0 %v1043
        %1101 = vmatpush1.bf16.msra.mxu0 %v1042
        %1102 = vmatprep.subr.bf16.mxu0 %v1041
        %1103 = vmatpush1.bf16.msra.mxu0 %v1040
        %1104 = vmatprep.subr.bf16.mxu0 %v1039
        %1105 = vmatpush1.bf16.msra.mxu0 %v1038
        %1106 = vmatprep.subr.bf16.mxu0 %v1037
        %1107 = vmatpush1.bf16.msra.mxu0 %v1036
        %1108 = vmatprep.subr.bf16.mxu0 %v1035
        %1109 = vmatpush1.bf16.msra.mxu0 %v1034
        %1110 = vmatprep.subr.bf16.mxu0 %v1033
        %1111 = vmatpush1.bf16.msra.mxu0 %v1032
        %1112 = vmatprep.subr.bf16.mxu0 %v1063
        %1113 = vmatpush2.bf16.msra.mxu0 %v1062
        %1114 = vmatprep.subr.bf16.mxu0 %v1061
        %1115 = vmatpush2.bf16.msra.mxu0 %v1060
        %1116 = vmatprep.subr.bf16.mxu0 %v1059
        %1117 = vmatpush2.bf16.msra.mxu0 %v1058
        %1118 = vmatprep.subr.bf16.mxu0 %v1057
        %1119 = vmatpush2.bf16.msra.mxu0 %v1056
        %1120 = vmatprep.subr.bf16.mxu0 %v1055
        %1121 = vmatpush2.bf16.msra.mxu0 %v1054
        %1122 = vmatprep.subr.bf16.mxu0 %v1053
        %1123 = vmatpush2.bf16.msra.mxu0 %v1052
        %1124 = vmatprep.subr.bf16.mxu0 %v1051
        %1125 = vmatpush2.bf16.msra.mxu0 %v1050
        %1126 = vmatprep.subr.bf16.mxu0 %v1049
        %1127 = vmatpush2.bf16.msra.mxu0 %v1048
        %1128 = vmatprep.mubr.bf16.mxu0 %v877
        %1129 = vmatmul.mubr.bf16.gmra.mxu0 %v876
        %v1130 = vpop.f32.mrf.mxu0
        %v1131 = vadd.f32 %v929, %v1130
        %v1132 = vpop.f32.mrf.mxu0
        %v1133 = vadd.f32 %v933, %v1132
        %v1134 = vpop.f32.mrf.mxu0
        %v1135 = vadd.f32 %v929, %v1134
        %v1136 = vpop.f32.mrf.mxu0
        %v1137 = vadd.f32 %v933, %v1136
        %1138 = vmatprep.mubr.bf16.mxu0 %v879
        %1139 = vmatmul.mubr.bf16.gmra.mxu0 %v878
        %v1140 = vpop.f32.mrf.mxu0
        %v1141 = vadd.f32 %v929, %v1140
        %v1142 = vpop.f32.mrf.mxu0
        %v1143 = vadd.f32 %v933, %v1142
        %v1144 = vpop.f32.mrf.mxu0
        %v1145 = vadd.f32 %v929, %v1144
        %v1146 = vpop.f32.mrf.mxu0
        %v1147 = vadd.f32 %v933, %v1146
        %1148 = vmatprep.mubr.bf16.mxu0 %v881
        %1149 = vmatmul.mubr.bf16.gmra.mxu0 %v880
        %v1150 = vpop.f32.mrf.mxu0
        %v1151 = vadd.f32 %v929, %v1150
        %v1152 = vpop.f32.mrf.mxu0
        %v1153 = vadd.f32 %v933, %v1152
        %v1154 = vpop.f32.mrf.mxu0
        %v1155 = vadd.f32 %v929, %v1154
        %v1156 = vpop.f32.mrf.mxu0
        %v1157 = vadd.f32 %v933, %v1156
        %1158 = vmatprep.mubr.bf16.mxu0 %v883
        %1159 = vmatmul.mubr.bf16.gmra.mxu0 %v882
        %v1160 = vpop.f32.mrf.mxu0
        %v1161 = vadd.f32 %v929, %v1160
        %v1162 = vpop.f32.mrf.mxu0
        %v1163 = vadd.f32 %v933, %v1162
        %v1164 = vpop.f32.mrf.mxu0
        %v1165 = vadd.f32 %v929, %v1164
        %v1166 = vpop.f32.mrf.mxu0
        %v1167 = vadd.f32 %v933, %v1166
        %1168 = vmatprep.mubr.bf16.mxu0 %v885
        %1169 = vmatmul.mubr.bf16.gmra.mxu0 %v884
        %v1170 = vpop.f32.mrf.mxu0
        %v1171 = vadd.f32 %v929, %v1170
        %v1172 = vpop.f32.mrf.mxu0
        %v1173 = vadd.f32 %v933, %v1172
        %v1174 = vpop.f32.mrf.mxu0
        %v1175 = vadd.f32 %v929, %v1174
        %v1176 = vpop.f32.mrf.mxu0
        %v1177 = vadd.f32 %v933, %v1176
        %1178 = vmatprep.mubr.bf16.mxu0 %v887
        %1179 = vmatmul.mubr.bf16.gmra.mxu0 %v886
        %v1180 = vpop.f32.mrf.mxu0
        %v1181 = vadd.f32 %v929, %v1180
        %v1182 = vpop.f32.mrf.mxu0
        %v1183 = vadd.f32 %v933, %v1182
        %v1184 = vpop.f32.mrf.mxu0
        %v1185 = vadd.f32 %v929, %v1184
        %v1186 = vpop.f32.mrf.mxu0
        %v1187 = vadd.f32 %v933, %v1186
        %1188 = vmatprep.mubr.bf16.mxu0 %v889
        %1189 = vmatmul.mubr.bf16.gmra.mxu0 %v888
        %v1190 = vpop.f32.mrf.mxu0
        %v1191 = vadd.f32 %v929, %v1190
        %v1192 = vpop.f32.mrf.mxu0
        %v1193 = vadd.f32 %v933, %v1192
        %v1194 = vpop.f32.mrf.mxu0
        %v1195 = vadd.f32 %v929, %v1194
        %v1196 = vpop.f32.mrf.mxu0
        %v1197 = vadd.f32 %v933, %v1196
        %1198 = vmatprep.mubr.bf16.mxu0 %v891
        %1199 = vmatmul.mubr.bf16.gmra.mxu0 %v890
        %v1200 = vpop.f32.mrf.mxu0
        %v1201 = vadd.f32 %v929, %v1200
        %v1202 = vpop.f32.mrf.mxu0
        %v1203 = vadd.f32 %v933, %v1202
        %v1204 = vpop.f32.mrf.mxu0
        %v1205 = vadd.f32 %v929, %v1204
        %v1206 = vpop.f32.mrf.mxu0
        %v1207 = vadd.f32 %v933, %v1206
        %1208 = vdwg.mxu0
        %vm1209 = vcmp.gt.f32.partialorder %v1131, 0.0
        %vm1210 = vcmp.gt.f32.partialorder %v1133, 0.0
        %vm1211 = vcmp.gt.f32.partialorder %v1135, 0.0
        %vm1212 = vcmp.gt.f32.partialorder %v1137, 0.0
        %vm1213 = vcmp.gt.f32.partialorder %v1141, 0.0
        %vm1214 = vcmp.gt.f32.partialorder %v1143, 0.0
        %vm1215 = vcmp.gt.f32.partialorder %v1145, 0.0
        %vm1216 = vcmp.gt.f32.partialorder %v1147, 0.0
        %vm1217 = vcmp.gt.f32.partialorder %v1151, 0.0
        %vm1218 = vcmp.gt.f32.partialorder %v1153, 0.0
        %vm1219 = vcmp.gt.f32.partialorder %v1155, 0.0
        %vm1220 = vcmp.gt.f32.partialorder %v1157, 0.0
        %vm1221 = vcmp.gt.f32.partialorder %v1161, 0.0
        %vm1222 = vcmp.gt.f32.partialorder %v1163, 0.0
        %vm1223 = vcmp.gt.f32.partialorder %v1165, 0.0
        %vm1224 = vcmp.gt.f32.partialorder %v1167, 0.0
        %vm1225 = vcmp.gt.f32.partialorder %v1171, 0.0
        %vm1226 = vcmp.gt.f32.partialorder %v1173, 0.0
        %vm1227 = vcmp.gt.f32.partialorder %v1175, 0.0
        %vm1228 = vcmp.gt.f32.partialorder %v1177, 0.0
        %vm1229 = vcmp.gt.f32.partialorder %v1181, 0.0
        %vm1230 = vcmp.gt.f32.partialorder %v1183, 0.0
        %vm1231 = vcmp.gt.f32.partialorder %v1185, 0.0
        %vm1232 = vcmp.gt.f32.partialorder %v1187, 0.0
        %vm1233 = vcmp.gt.f32.partialorder %v1191, 0.0
        %vm1234 = vcmp.gt.f32.partialorder %v1193, 0.0
        %vm1235 = vcmp.gt.f32.partialorder %v1195, 0.0
        %vm1236 = vcmp.gt.f32.partialorder %v1197, 0.0
        %vm1237 = vcmp.gt.f32.partialorder %v1201, 0.0
        %vm1238 = vcmp.gt.f32.partialorder %v1203, 0.0
        %vm1239 = vcmp.gt.f32.partialorder %v1205, 0.0
        %vm1240 = vcmp.gt.f32.partialorder %v1207, 0.0
        %v1241 = vmul.f32 %v1131, 0.2
        %v1242 = vmul.f32 %v1133, 0.2
        %v1243 = vmul.f32 %v1135, 0.2
        %v1244 = vmul.f32 %v1137, 0.2
        %v1245 = vmul.f32 %v1141, 0.2
        %v1246 = vmul.f32 %v1143, 0.2
        %v1247 = vmul.f32 %v1145, 0.2
        %v1248 = vmul.f32 %v1147, 0.2
        %v1249 = vmul.f32 %v1151, 0.2
        %v1250 = vmul.f32 %v1153, 0.2
        %v1251 = vmul.f32 %v1155, 0.2
        %v1252 = vmul.f32 %v1157, 0.2
        %v1253 = vmul.f32 %v1161, 0.2
        %v1254 = vmul.f32 %v1163, 0.2
        %v1255 = vmul.f32 %v1165, 0.2
        %v1256 = vmul.f32 %v1167, 0.2
        %v1257 = vmul.f32 %v1171, 0.2
        %v1258 = vmul.f32 %v1173, 0.2
        %v1259 = vmul.f32 %v1175, 0.2
        %v1260 = vmul.f32 %v1177, 0.2
        %v1261 = vmul.f32 %v1181, 0.2
        %v1262 = vmul.f32 %v1183, 0.2
        %v1263 = vmul.f32 %v1185, 0.2
        %v1264 = vmul.f32 %v1187, 0.2
        %v1265 = vmul.f32 %v1191, 0.2
        %v1266 = vmul.f32 %v1193, 0.2
        %v1267 = vmul.f32 %v1195, 0.2
        %v1268 = vmul.f32 %v1197, 0.2
        %v1269 = vmul.f32 %v1201, 0.2
        %v1270 = vmul.f32 %v1203, 0.2
        %v1271 = vmul.f32 %v1205, 0.2
        %v1272 = vmul.f32 %v1207, 0.2
        %v1273 = vsel %vm1209, %v1131, %v1241
        %v1274 = vsel %vm1210, %v1133, %v1242
        %v1275 = vsel %vm1211, %v1135, %v1243
        %v1276 = vsel %vm1212, %v1137, %v1244
        %v1277 = vsel %vm1213, %v1141, %v1245
        %v1278 = vsel %vm1214, %v1143, %v1246
        %v1279 = vsel %vm1215, %v1145, %v1247
        %v1280 = vsel %vm1216, %v1147, %v1248
        %v1281 = vsel %vm1217, %v1151, %v1249
        %v1282 = vsel %vm1218, %v1153, %v1250
        %v1283 = vsel %vm1219, %v1155, %v1251
        %v1284 = vsel %vm1220, %v1157, %v1252
        %v1285 = vsel %vm1221, %v1161, %v1253
        %v1286 = vsel %vm1222, %v1163, %v1254
        %v1287 = vsel %vm1223, %v1165, %v1255
        %v1288 = vsel %vm1224, %v1167, %v1256
        %v1289 = vsel %vm1225, %v1171, %v1257
        %v1290 = vsel %vm1226, %v1173, %v1258
        %v1291 = vsel %vm1227, %v1175, %v1259
        %v1292 = vsel %vm1228, %v1177, %v1260
        %v1293 = vsel %vm1229, %v1181, %v1261
        %v1294 = vsel %vm1230, %v1183, %v1262
        %v1295 = vsel %vm1231, %v1185, %v1263
        %v1296 = vsel %vm1232, %v1187, %v1264
        %v1297 = vsel %vm1233, %v1191, %v1265
        %v1298 = vsel %vm1234, %v1193, %v1266
        %v1299 = vsel %vm1235, %v1195, %v1267
        %v1300 = vsel %vm1236, %v1197, %v1268
        %v1301 = vsel %vm1237, %v1201, %v1269
        %v1302 = vsel %vm1238, %v1203, %v1270
        %v1303 = vsel %vm1239, %v1205, %v1271
        %v1304 = vsel %vm1240, %v1207, %v1272
        %v1305 = vpack.c.bf16 %v1275, %v1273
        %v1306 = vpack.c.bf16 %v1276, %v1274
        %v1307 = vpack.c.bf16 %v1279, %v1277
        %v1308 = vpack.c.bf16 %v1280, %v1278
        %v1309 = vpack.c.bf16 %v1283, %v1281
        %v1310 = vpack.c.bf16 %v1284, %v1282
        %v1311 = vpack.c.bf16 %v1287, %v1285
        %v1312 = vpack.c.bf16 %v1288, %v1286
        %v1313 = vpack.c.bf16 %v1291, %v1289
        %v1314 = vpack.c.bf16 %v1292, %v1290
        %v1315 = vpack.c.bf16 %v1295, %v1293
        %v1316 = vpack.c.bf16 %v1296, %v1294
        %v1317 = vpack.c.bf16 %v1299, %v1297
        %v1318 = vpack.c.bf16 %v1300, %v1298
        %v1319 = vpack.c.bf16 %v1303, %v1301
        %v1320 = vpack.c.bf16 %v1304, %v1302
        %v1321 = vld [vmem:[#allocation7] sm:$0xff]
        %v1322 = vld [vmem:[#allocation7 + $0x8] sm:$0xff]
        %v1323 = vld [vmem:[#allocation7 + $0x10] sm:$0xff]
        %v1324 = vld [vmem:[#allocation7 + $0x18] sm:$0xff]
        %v1325 = vld [vmem:[#allocation7 + $0x20] sm:$0xff]
        %v1326 = vld [vmem:[#allocation7 + $0x28] sm:$0xff]
        %v1327 = vld [vmem:[#allocation7 + $0x30] sm:$0xff]
        %v1328 = vld [vmem:[#allocation7 + $0x38] sm:$0xff]
        %v1329 = vld [vmem:[#allocation7 + $0x40] sm:$0xff]
        %v1330 = vld [vmem:[#allocation7 + $0x48] sm:$0xff]
        %v1331 = vld [vmem:[#allocation7 + $0x50] sm:$0xff]
        %v1332 = vld [vmem:[#allocation7 + $0x58] sm:$0xff]
        %v1333 = vld [vmem:[#allocation7 + $0x60] sm:$0xff]
        %v1334 = vld [vmem:[#allocation7 + $0x68] sm:$0xff]
        %v1335 = vld [vmem:[#allocation7 + $0x70] sm:$0xff]
        %v1336 = vld [vmem:[#allocation7 + $0x78] sm:$0xff]
        %v1337 = vld [vmem:[#allocation7 + $0x80] sm:$0xff]
        %v1338 = vld [vmem:[#allocation7 + $0x88] sm:$0xff]
        %v1339 = vld [vmem:[#allocation7 + $0x90] sm:$0xff]
        %v1340 = vld [vmem:[#allocation7 + $0x98] sm:$0xff]
        %v1341 = vld [vmem:[#allocation7 + $0xa0] sm:$0xff]
        %v1342 = vld [vmem:[#allocation7 + $0xa8] sm:$0xff]
        %v1343 = vld [vmem:[#allocation7 + $0xb0] sm:$0xff]
        %v1344 = vld [vmem:[#allocation7 + $0xb8] sm:$0xff]
        %v1345 = vld [vmem:[#allocation7 + $0xc0] sm:$0xff]
        %v1346 = vld [vmem:[#allocation7 + $0xc8] sm:$0xff]
        %v1347 = vld [vmem:[#allocation7 + $0xd0] sm:$0xff]
        %v1348 = vld [vmem:[#allocation7 + $0xd8] sm:$0xff]
        %v1349 = vld [vmem:[#allocation7 + $0xe0] sm:$0xff]
        %v1350 = vld [vmem:[#allocation7 + $0xe8] sm:$0xff]
        %v1351 = vld [vmem:[#allocation7 + $0xf0] sm:$0xff]
        %v1352 = vld [vmem:[#allocation7 + $0xf8] sm:$0xff]
        %v1353 = vld [vmem:[%s6] sm:$0x3]
        %v1355 = vlaneseq
        %v1356 = vshrl.u32 %v1355, 7
        %v1357 = vsub.s32 0, %v1356
        %v1358 = vrot.slane %v1353, %v1357
        %v1359 = vlaneseq
        %v1360 = vshrl.u32 %v1359, 7
        %v1361 = vsub.s32 1, %v1360
        %v1362 = vrot.slane %v1353, %v1361
        %v1397 = vunpack.c.l.b16 %v1321
        %v1398 = vunpack.c.h.b16 %v1321
        %v1399 = vunpack.c.l.b16 %v1322
        %v1400 = vunpack.c.h.b16 %v1322
        %v1401 = vunpack.c.l.b16 %v1323
        %v1402 = vunpack.c.h.b16 %v1323
        %v1403 = vunpack.c.l.b16 %v1324
        %v1404 = vunpack.c.h.b16 %v1324
        %v1405 = vunpack.c.l.b16 %v1325
        %v1406 = vunpack.c.h.b16 %v1325
        %v1407 = vunpack.c.l.b16 %v1326
        %v1408 = vunpack.c.h.b16 %v1326
        %v1409 = vunpack.c.l.b16 %v1327
        %v1410 = vunpack.c.h.b16 %v1327
        %v1411 = vunpack.c.l.b16 %v1328
        %v1412 = vunpack.c.h.b16 %v1328
        %v1413 = vunpack.c.l.b16 %v1329
        %v1414 = vunpack.c.h.b16 %v1329
        %v1415 = vunpack.c.l.b16 %v1330
        %v1416 = vunpack.c.h.b16 %v1330
        %v1417 = vunpack.c.l.b16 %v1331
        %v1418 = vunpack.c.h.b16 %v1331
        %v1419 = vunpack.c.l.b16 %v1332
        %v1420 = vunpack.c.h.b16 %v1332
        %v1421 = vunpack.c.l.b16 %v1333
        %v1422 = vunpack.c.h.b16 %v1333
        %v1423 = vunpack.c.l.b16 %v1334
        %v1424 = vunpack.c.h.b16 %v1334
        %v1425 = vunpack.c.l.b16 %v1335
        %v1426 = vunpack.c.h.b16 %v1335
        %v1427 = vunpack.c.l.b16 %v1336
        %v1428 = vunpack.c.h.b16 %v1336
        %v1429 = vunpack.c.l.b16 %v1337
        %v1430 = vunpack.c.h.b16 %v1337
        %v1431 = vunpack.c.l.b16 %v1338
        %v1432 = vunpack.c.h.b16 %v1338
        %v1433 = vunpack.c.l.b16 %v1339
        %v1434 = vunpack.c.h.b16 %v1339
        %v1435 = vunpack.c.l.b16 %v1340
        %v1436 = vunpack.c.h.b16 %v1340
        %v1437 = vunpack.c.l.b16 %v1341
        %v1438 = vunpack.c.h.b16 %v1341
        %v1439 = vunpack.c.l.b16 %v1342
        %v1440 = vunpack.c.h.b16 %v1342
        %v1441 = vunpack.c.l.b16 %v1343
        %v1442 = vunpack.c.h.b16 %v1343
        %v1443 = vunpack.c.l.b16 %v1344
        %v1444 = vunpack.c.h.b16 %v1344
        %v1445 = vunpack.c.l.b16 %v1345
        %v1446 = vunpack.c.h.b16 %v1345
        %v1447 = vunpack.c.l.b16 %v1346
        %v1448 = vunpack.c.h.b16 %v1346
        %v1449 = vunpack.c.l.b16 %v1347
        %v1450 = vunpack.c.h.b16 %v1347
        %v1451 = vunpack.c.l.b16 %v1348
        %v1452 = vunpack.c.h.b16 %v1348
        %v1453 = vunpack.c.l.b16 %v1349
        %v1454 = vunpack.c.h.b16 %v1349
        %v1455 = vunpack.c.l.b16 %v1350
        %v1456 = vunpack.c.h.b16 %v1350
        %v1457 = vunpack.c.l.b16 %v1351
        %v1458 = vunpack.c.h.b16 %v1351
        %v1459 = vunpack.c.l.b16 %v1352
        %v1460 = vunpack.c.h.b16 %v1352
        %v1461 = vpack.c.b16 %v1399, %v1397
        %v1462 = vpack.c.b16 %v1400, %v1398
        %v1463 = vpack.c.b16 %v1403, %v1401
        %v1464 = vpack.c.b16 %v1404, %v1402
        %v1465 = vpack.c.b16 %v1407, %v1405
        %v1466 = vpack.c.b16 %v1408, %v1406
        %v1467 = vpack.c.b16 %v1411, %v1409
        %v1468 = vpack.c.b16 %v1412, %v1410
        %v1469 = vpack.c.b16 %v1415, %v1413
        %v1470 = vpack.c.b16 %v1416, %v1414
        %v1471 = vpack.c.b16 %v1419, %v1417
        %v1472 = vpack.c.b16 %v1420, %v1418
        %v1473 = vpack.c.b16 %v1423, %v1421
        %v1474 = vpack.c.b16 %v1424, %v1422
        %v1475 = vpack.c.b16 %v1427, %v1425
        %v1476 = vpack.c.b16 %v1428, %v1426
        %v1477 = vpack.c.b16 %v1431, %v1429
        %v1478 = vpack.c.b16 %v1432, %v1430
        %v1479 = vpack.c.b16 %v1435, %v1433
        %v1480 = vpack.c.b16 %v1436, %v1434
        %v1481 = vpack.c.b16 %v1439, %v1437
        %v1482 = vpack.c.b16 %v1440, %v1438
        %v1483 = vpack.c.b16 %v1443, %v1441
        %v1484 = vpack.c.b16 %v1444, %v1442
        %v1485 = vpack.c.b16 %v1447, %v1445
        %v1486 = vpack.c.b16 %v1448, %v1446
        %v1487 = vpack.c.b16 %v1451, %v1449
        %v1488 = vpack.c.b16 %v1452, %v1450
        %v1489 = vpack.c.b16 %v1455, %v1453
        %v1490 = vpack.c.b16 %v1456, %v1454
        %v1491 = vpack.c.b16 %v1459, %v1457
        %v1492 = vpack.c.b16 %v1460, %v1458
        %1525 = vmatprep.subr.bf16.mxu0 %v1476
        %1526 = vmatpush1.bf16.msra.mxu0 %v1475
        %1527 = vmatprep.subr.bf16.mxu0 %v1474
        %1528 = vmatpush1.bf16.msra.mxu0 %v1473
        %1529 = vmatprep.subr.bf16.mxu0 %v1472
        %1530 = vmatpush1.bf16.msra.mxu0 %v1471
        %1531 = vmatprep.subr.bf16.mxu0 %v1470
        %1532 = vmatpush1.bf16.msra.mxu0 %v1469
        %1533 = vmatprep.subr.bf16.mxu0 %v1468
        %1534 = vmatpush1.bf16.msra.mxu0 %v1467
        %1535 = vmatprep.subr.bf16.mxu0 %v1466
        %1536 = vmatpush1.bf16.msra.mxu0 %v1465
        %1537 = vmatprep.subr.bf16.mxu0 %v1464
        %1538 = vmatpush1.bf16.msra.mxu0 %v1463
        %1539 = vmatprep.subr.bf16.mxu0 %v1462
        %1540 = vmatpush1.bf16.msra.mxu0 %v1461
        %1541 = vmatprep.subr.bf16.mxu0 %v1492
        %1542 = vmatpush2.bf16.msra.mxu0 %v1491
        %1543 = vmatprep.subr.bf16.mxu0 %v1490
        %1544 = vmatpush2.bf16.msra.mxu0 %v1489
        %1545 = vmatprep.subr.bf16.mxu0 %v1488
        %1546 = vmatpush2.bf16.msra.mxu0 %v1487
        %1547 = vmatprep.subr.bf16.mxu0 %v1486
        %1548 = vmatpush2.bf16.msra.mxu0 %v1485
        %1549 = vmatprep.subr.bf16.mxu0 %v1484
        %1550 = vmatpush2.bf16.msra.mxu0 %v1483
        %1551 = vmatprep.subr.bf16.mxu0 %v1482
        %1552 = vmatpush2.bf16.msra.mxu0 %v1481
        %1553 = vmatprep.subr.bf16.mxu0 %v1480
        %1554 = vmatpush2.bf16.msra.mxu0 %v1479
        %1555 = vmatprep.subr.bf16.mxu0 %v1478
        %1556 = vmatpush2.bf16.msra.mxu0 %v1477
        %1557 = vmatprep.mubr.bf16.mxu0 %v1306
        %1558 = vmatmul.mubr.bf16.gmra.mxu0 %v1305
        %v1559 = vpop.f32.mrf.mxu0
        %v1560 = vadd.f32 %v1358, %v1559
        %v1561 = vpop.f32.mrf.mxu0
        %v1562 = vadd.f32 %v1362, %v1561
        %v1563 = vpop.f32.mrf.mxu0
        %v1564 = vadd.f32 %v1358, %v1563
        %v1565 = vpop.f32.mrf.mxu0
        %v1566 = vadd.f32 %v1362, %v1565
        %1567 = vmatprep.mubr.bf16.mxu0 %v1308
        %1568 = vmatmul.mubr.bf16.gmra.mxu0 %v1307
        %v1569 = vpop.f32.mrf.mxu0
        %v1570 = vadd.f32 %v1358, %v1569
        %v1571 = vpop.f32.mrf.mxu0
        %v1572 = vadd.f32 %v1362, %v1571
        %v1573 = vpop.f32.mrf.mxu0
        %v1574 = vadd.f32 %v1358, %v1573
        %v1575 = vpop.f32.mrf.mxu0
        %v1576 = vadd.f32 %v1362, %v1575
        %1577 = vmatprep.mubr.bf16.mxu0 %v1310
        %1578 = vmatmul.mubr.bf16.gmra.mxu0 %v1309
        %v1579 = vpop.f32.mrf.mxu0
        %v1580 = vadd.f32 %v1358, %v1579
        %v1581 = vpop.f32.mrf.mxu0
        %v1582 = vadd.f32 %v1362, %v1581
        %v1583 = vpop.f32.mrf.mxu0
        %v1584 = vadd.f32 %v1358, %v1583
        %v1585 = vpop.f32.mrf.mxu0
        %v1586 = vadd.f32 %v1362, %v1585
        %1587 = vmatprep.mubr.bf16.mxu0 %v1312
        %1588 = vmatmul.mubr.bf16.gmra.mxu0 %v1311
        %v1589 = vpop.f32.mrf.mxu0
        %v1590 = vadd.f32 %v1358, %v1589
        %v1591 = vpop.f32.mrf.mxu0
        %v1592 = vadd.f32 %v1362, %v1591
        %v1593 = vpop.f32.mrf.mxu0
        %v1594 = vadd.f32 %v1358, %v1593
        %v1595 = vpop.f32.mrf.mxu0
        %v1596 = vadd.f32 %v1362, %v1595
        %1597 = vmatprep.mubr.bf16.mxu0 %v1314
        %1598 = vmatmul.mubr.bf16.gmra.mxu0 %v1313
        %v1599 = vpop.f32.mrf.mxu0
        %v1600 = vadd.f32 %v1358, %v1599
        %v1601 = vpop.f32.mrf.mxu0
        %v1602 = vadd.f32 %v1362, %v1601
        %v1603 = vpop.f32.mrf.mxu0
        %v1604 = vadd.f32 %v1358, %v1603
        %v1605 = vpop.f32.mrf.mxu0
        %v1606 = vadd.f32 %v1362, %v1605
        %1607 = vmatprep.mubr.bf16.mxu0 %v1316
        %1608 = vmatmul.mubr.bf16.gmra.mxu0 %v1315
        %v1609 = vpop.f32.mrf.mxu0
        %v1610 = vadd.f32 %v1358, %v1609
        %v1611 = vpop.f32.mrf.mxu0
        %v1612 = vadd.f32 %v1362, %v1611
        %v1613 = vpop.f32.mrf.mxu0
        %v1614 = vadd.f32 %v1358, %v1613
        %v1615 = vpop.f32.mrf.mxu0
        %v1616 = vadd.f32 %v1362, %v1615
        %1617 = vmatprep.mubr.bf16.mxu0 %v1318
        %1618 = vmatmul.mubr.bf16.gmra.mxu0 %v1317
        %v1619 = vpop.f32.mrf.mxu0
        %v1620 = vadd.f32 %v1358, %v1619
        %v1621 = vpop.f32.mrf.mxu0
        %v1622 = vadd.f32 %v1362, %v1621
        %v1623 = vpop.f32.mrf.mxu0
        %v1624 = vadd.f32 %v1358, %v1623
        %v1625 = vpop.f32.mrf.mxu0
        %v1626 = vadd.f32 %v1362, %v1625
        %1627 = vmatprep.mubr.bf16.mxu0 %v1320
        %1628 = vmatmul.mubr.bf16.gmra.mxu0 %v1319
        %v1629 = vpop.f32.mrf.mxu0
        %v1630 = vadd.f32 %v1358, %v1629
        %v1631 = vpop.f32.mrf.mxu0
        %v1632 = vadd.f32 %v1362, %v1631
        %v1633 = vpop.f32.mrf.mxu0
        %v1634 = vadd.f32 %v1358, %v1633
        %v1635 = vpop.f32.mrf.mxu0
        %v1636 = vadd.f32 %v1362, %v1635
        %1637 = vdwg.mxu0
        %v1638 = vadd.f32 %v844, %v1560
        %v1639 = vadd.f32 %v845, %v1562
        %v1640 = vadd.f32 %v846, %v1564
        %v1641 = vadd.f32 %v847, %v1566
        %v1642 = vadd.f32 %v848, %v1570
        %v1643 = vadd.f32 %v849, %v1572
        %v1644 = vadd.f32 %v850, %v1574
        %v1645 = vadd.f32 %v851, %v1576
        %v1646 = vadd.f32 %v852, %v1580
        %v1647 = vadd.f32 %v853, %v1582
        %v1648 = vadd.f32 %v854, %v1584
        %v1649 = vadd.f32 %v855, %v1586
        %v1650 = vadd.f32 %v856, %v1590
        %v1651 = vadd.f32 %v857, %v1592
        %v1652 = vadd.f32 %v858, %v1594
        %v1653 = vadd.f32 %v859, %v1596
        %v1654 = vadd.f32 %v860, %v1600
        %v1655 = vadd.f32 %v861, %v1602
        %v1656 = vadd.f32 %v862, %v1604
        %v1657 = vadd.f32 %v863, %v1606
        %v1658 = vadd.f32 %v864, %v1610
        %v1659 = vadd.f32 %v865, %v1612
        %v1660 = vadd.f32 %v866, %v1614
        %v1661 = vadd.f32 %v867, %v1616
        %v1662 = vadd.f32 %v868, %v1620
        %v1663 = vadd.f32 %v869, %v1622
        %v1664 = vadd.f32 %v870, %v1624
        %v1665 = vadd.f32 %v871, %v1626
        %v1666 = vadd.f32 %v872, %v1630
        %v1667 = vadd.f32 %v873, %v1632
        %v1668 = vadd.f32 %v874, %v1634
        %v1669 = vadd.f32 %v875, %v1636
        %vm1670 = vcmp.gt.f32.partialorder %v1638, 0.0
        %vm1671 = vcmp.gt.f32.partialorder %v1639, 0.0
        %vm1672 = vcmp.gt.f32.partialorder %v1640, 0.0
        %vm1673 = vcmp.gt.f32.partialorder %v1641, 0.0
        %vm1674 = vcmp.gt.f32.partialorder %v1642, 0.0
        %vm1675 = vcmp.gt.f32.partialorder %v1643, 0.0
        %vm1676 = vcmp.gt.f32.partialorder %v1644, 0.0
        %vm1677 = vcmp.gt.f32.partialorder %v1645, 0.0
        %vm1678 = vcmp.gt.f32.partialorder %v1646, 0.0
        %vm1679 = vcmp.gt.f32.partialorder %v1647, 0.0
        %vm1680 = vcmp.gt.f32.partialorder %v1648, 0.0
        %vm1681 = vcmp.gt.f32.partialorder %v1649, 0.0
        %vm1682 = vcmp.gt.f32.partialorder %v1650, 0.0
        %vm1683 = vcmp.gt.f32.partialorder %v1651, 0.0
        %vm1684 = vcmp.gt.f32.partialorder %v1652, 0.0
        %vm1685 = vcmp.gt.f32.partialorder %v1653, 0.0
        %vm1686 = vcmp.gt.f32.partialorder %v1654, 0.0
        %vm1687 = vcmp.gt.f32.partialorder %v1655, 0.0
        %vm1688 = vcmp.gt.f32.partialorder %v1656, 0.0
        %vm1689 = vcmp.gt.f32.partialorder %v1657, 0.0
        %vm1690 = vcmp.gt.f32.partialorder %v1658, 0.0
        %vm1691 = vcmp.gt.f32.partialorder %v1659, 0.0
        %vm1692 = vcmp.gt.f32.partialorder %v1660, 0.0
        %vm1693 = vcmp.gt.f32.partialorder %v1661, 0.0
        %vm1694 = vcmp.gt.f32.partialorder %v1662, 0.0
        %vm1695 = vcmp.gt.f32.partialorder %v1663, 0.0
        %vm1696 = vcmp.gt.f32.partialorder %v1664, 0.0
        %vm1697 = vcmp.gt.f32.partialorder %v1665, 0.0
        %vm1698 = vcmp.gt.f32.partialorder %v1666, 0.0
        %vm1699 = vcmp.gt.f32.partialorder %v1667, 0.0
        %vm1700 = vcmp.gt.f32.partialorder %v1668, 0.0
        %vm1701 = vcmp.gt.f32.partialorder %v1669, 0.0
        %v1702 = vmul.f32 %v1638, 0.2
        %v1703 = vmul.f32 %v1639, 0.2
        %v1704 = vmul.f32 %v1640, 0.2
        %v1705 = vmul.f32 %v1641, 0.2
        %v1706 = vmul.f32 %v1642, 0.2
        %v1707 = vmul.f32 %v1643, 0.2
        %v1708 = vmul.f32 %v1644, 0.2
        %v1709 = vmul.f32 %v1645, 0.2
        %v1710 = vmul.f32 %v1646, 0.2
        %v1711 = vmul.f32 %v1647, 0.2
        %v1712 = vmul.f32 %v1648, 0.2
        %v1713 = vmul.f32 %v1649, 0.2
        %v1714 = vmul.f32 %v1650, 0.2
        %v1715 = vmul.f32 %v1651, 0.2
        %v1716 = vmul.f32 %v1652, 0.2
        %v1717 = vmul.f32 %v1653, 0.2
        %v1718 = vmul.f32 %v1654, 0.2
        %v1719 = vmul.f32 %v1655, 0.2
        %v1720 = vmul.f32 %v1656, 0.2
        %v1721 = vmul.f32 %v1657, 0.2
        %v1722 = vmul.f32 %v1658, 0.2
        %v1723 = vmul.f32 %v1659, 0.2
        %v1724 = vmul.f32 %v1660, 0.2
        %v1725 = vmul.f32 %v1661, 0.2
        %v1726 = vmul.f32 %v1662, 0.2
        %v1727 = vmul.f32 %v1663, 0.2
        %v1728 = vmul.f32 %v1664, 0.2
        %v1729 = vmul.f32 %v1665, 0.2
        %v1730 = vmul.f32 %v1666, 0.2
        %v1731 = vmul.f32 %v1667, 0.2
        %v1732 = vmul.f32 %v1668, 0.2
        %v1733 = vmul.f32 %v1669, 0.2
        %v1734 = vsel %vm1670, %v1638, %v1702
        %v1735 = vsel %vm1671, %v1639, %v1703
        %v1736 = vsel %vm1672, %v1640, %v1704
        %v1737 = vsel %vm1673, %v1641, %v1705
        %v1738 = vsel %vm1674, %v1642, %v1706
        %v1739 = vsel %vm1675, %v1643, %v1707
        %v1740 = vsel %vm1676, %v1644, %v1708
        %v1741 = vsel %vm1677, %v1645, %v1709
        %v1742 = vsel %vm1678, %v1646, %v1710
        %v1743 = vsel %vm1679, %v1647, %v1711
        %v1744 = vsel %vm1680, %v1648, %v1712
        %v1745 = vsel %vm1681, %v1649, %v1713
        %v1746 = vsel %vm1682, %v1650, %v1714
        %v1747 = vsel %vm1683, %v1651, %v1715
        %v1748 = vsel %vm1684, %v1652, %v1716
        %v1749 = vsel %vm1685, %v1653, %v1717
        %v1750 = vsel %vm1686, %v1654, %v1718
        %v1751 = vsel %vm1687, %v1655, %v1719
        %v1752 = vsel %vm1688, %v1656, %v1720
        %v1753 = vsel %vm1689, %v1657, %v1721
        %v1754 = vsel %vm1690, %v1658, %v1722
        %v1755 = vsel %vm1691, %v1659, %v1723
        %v1756 = vsel %vm1692, %v1660, %v1724
        %v1757 = vsel %vm1693, %v1661, %v1725
        %v1758 = vsel %vm1694, %v1662, %v1726
        %v1759 = vsel %vm1695, %v1663, %v1727
        %v1760 = vsel %vm1696, %v1664, %v1728
        %v1761 = vsel %vm1697, %v1665, %v1729
        %v1762 = vsel %vm1698, %v1666, %v1730
        %v1763 = vsel %vm1699, %v1667, %v1731
        %v1764 = vsel %vm1700, %v1668, %v1732
        %v1765 = vsel %vm1701, %v1669, %v1733
        %v1766 = vpack.c.bf16 %v1736, %v1734
        %v1767 = vpack.c.bf16 %v1737, %v1735
        %v1768 = vpack.c.bf16 %v1740, %v1738
        %v1769 = vpack.c.bf16 %v1741, %v1739
        %v1770 = vpack.c.bf16 %v1744, %v1742
        %v1771 = vpack.c.bf16 %v1745, %v1743
        %v1772 = vpack.c.bf16 %v1748, %v1746
        %v1773 = vpack.c.bf16 %v1749, %v1747
        %v1774 = vpack.c.bf16 %v1752, %v1750
        %v1775 = vpack.c.bf16 %v1753, %v1751
        %v1776 = vpack.c.bf16 %v1756, %v1754
        %v1777 = vpack.c.bf16 %v1757, %v1755
        %v1778 = vpack.c.bf16 %v1760, %v1758
        %v1779 = vpack.c.bf16 %v1761, %v1759
        %v1780 = vpack.c.bf16 %v1764, %v1762
        %v1781 = vpack.c.bf16 %v1765, %v1763
        %v1782 = vld [vmem:[#allocation9] sm:$0xf]
        %v1783 = vld [vmem:[#allocation9 + $0x4] sm:$0xf]
        %v1784 = vld [vmem:[#allocation9 + $0x8] sm:$0xf]
        %v1785 = vld [vmem:[#allocation9 + $0xc] sm:$0xf]
        %v1786 = vld [vmem:[#allocation9 + $0x10] sm:$0xf]
        %v1787 = vld [vmem:[#allocation9 + $0x14] sm:$0xf]
        %v1788 = vld [vmem:[#allocation9 + $0x18] sm:$0xf]
        %v1789 = vld [vmem:[#allocation9 + $0x1c] sm:$0xf]
        %v1790 = vld [vmem:[#allocation9 + $0x20] sm:$0xf]
        %v1791 = vld [vmem:[#allocation9 + $0x24] sm:$0xf]
        %v1792 = vld [vmem:[#allocation9 + $0x28] sm:$0xf]
        %v1793 = vld [vmem:[#allocation9 + $0x2c] sm:$0xf]
        %v1794 = vld [vmem:[#allocation9 + $0x30] sm:$0xf]
        %v1795 = vld [vmem:[#allocation9 + $0x34] sm:$0xf]
        %v1796 = vld [vmem:[#allocation9 + $0x38] sm:$0xf]
        %v1797 = vld [vmem:[#allocation9 + $0x3c] sm:$0xf]
        %v1798 = vld [vmem:[#allocation9 + $0x40] sm:$0xf]
        %v1799 = vld [vmem:[#allocation9 + $0x44] sm:$0xf]
        %v1800 = vld [vmem:[#allocation9 + $0x48] sm:$0xf]
        %v1801 = vld [vmem:[#allocation9 + $0x4c] sm:$0xf]
        %v1802 = vld [vmem:[#allocation9 + $0x50] sm:$0xf]
        %v1803 = vld [vmem:[#allocation9 + $0x54] sm:$0xf]
        %v1804 = vld [vmem:[#allocation9 + $0x58] sm:$0xf]
        %v1805 = vld [vmem:[#allocation9 + $0x5c] sm:$0xf]
        %v1806 = vld [vmem:[#allocation9 + $0x60] sm:$0xf]
        %v1807 = vld [vmem:[#allocation9 + $0x64] sm:$0xf]
        %v1808 = vld [vmem:[#allocation9 + $0x68] sm:$0xf]
        %v1809 = vld [vmem:[#allocation9 + $0x6c] sm:$0xf]
        %v1810 = vld [vmem:[#allocation9 + $0x70] sm:$0xf]
        %v1811 = vld [vmem:[#allocation9 + $0x74] sm:$0xf]
        %v1812 = vld [vmem:[#allocation9 + $0x78] sm:$0xf]
        %v1813 = vld [vmem:[#allocation9 + $0x7c] sm:$0xf]
        %v1814 = vld [vmem:[%s8] sm:$0x1]
        %v1816 = vlaneseq
        %v1817 = vshrl.u32 %v1816, 7
        %v1818 = vsub.s32 0, %v1817
        %v1819 = vrot.slane %v1814, %v1818
        %v1853 = vunpack.c.l.b16 %v1782
        %v1854 = vunpack.c.l.b16 %v1783
        %v1855 = vunpack.c.l.b16 %v1784
        %v1856 = vunpack.c.l.b16 %v1785
        %v1857 = vunpack.c.l.b16 %v1786
        %v1858 = vunpack.c.l.b16 %v1787
        %v1859 = vunpack.c.l.b16 %v1788
        %v1860 = vunpack.c.l.b16 %v1789
        %v1861 = vunpack.c.l.b16 %v1790
        %v1862 = vunpack.c.l.b16 %v1791
        %v1863 = vunpack.c.l.b16 %v1792
        %v1864 = vunpack.c.l.b16 %v1793
        %v1865 = vunpack.c.l.b16 %v1794
        %v1866 = vunpack.c.l.b16 %v1795
        %v1867 = vunpack.c.l.b16 %v1796
        %v1868 = vunpack.c.l.b16 %v1797
        %v1869 = vunpack.c.l.b16 %v1798
        %v1870 = vunpack.c.l.b16 %v1799
        %v1871 = vunpack.c.l.b16 %v1800
        %v1872 = vunpack.c.l.b16 %v1801
        %v1873 = vunpack.c.l.b16 %v1802
        %v1874 = vunpack.c.l.b16 %v1803
        %v1875 = vunpack.c.l.b16 %v1804
        %v1876 = vunpack.c.l.b16 %v1805
        %v1877 = vunpack.c.l.b16 %v1806
        %v1878 = vunpack.c.l.b16 %v1807
        %v1879 = vunpack.c.l.b16 %v1808
        %v1880 = vunpack.c.l.b16 %v1809
        %v1881 = vunpack.c.l.b16 %v1810
        %v1882 = vunpack.c.l.b16 %v1811
        %v1883 = vunpack.c.l.b16 %v1812
        %v1884 = vunpack.c.l.b16 %v1813
        %v1885 = vpack.c.b16 %v1854, %v1853
        %v1886 = vpack.c.b16 %v1856, %v1855
        %v1887 = vpack.c.b16 %v1858, %v1857
        %v1888 = vpack.c.b16 %v1860, %v1859
        %v1889 = vpack.c.b16 %v1862, %v1861
        %v1890 = vpack.c.b16 %v1864, %v1863
        %v1891 = vpack.c.b16 %v1866, %v1865
        %v1892 = vpack.c.b16 %v1868, %v1867
        %v1893 = vpack.c.b16 %v1870, %v1869
        %v1894 = vpack.c.b16 %v1872, %v1871
        %v1895 = vpack.c.b16 %v1874, %v1873
        %v1896 = vpack.c.b16 %v1876, %v1875
        %v1897 = vpack.c.b16 %v1878, %v1877
        %v1898 = vpack.c.b16 %v1880, %v1879
        %v1899 = vpack.c.b16 %v1882, %v1881
        %v1900 = vpack.c.b16 %v1884, %v1883
        %1917 = vmatprep.subr.bf16.mxu0 0
        %1918 = vmatpush1.bf16.msra.mxu0 %v1892
        %1919 = vmatprep.subr.bf16.mxu0 0
        %1920 = vmatpush1.bf16.msra.mxu0 %v1891
        %1921 = vmatprep.subr.bf16.mxu0 0
        %1922 = vmatpush1.bf16.msra.mxu0 %v1890
        %1923 = vmatprep.subr.bf16.mxu0 0
        %1924 = vmatpush1.bf16.msra.mxu0 %v1889
        %1925 = vmatprep.subr.bf16.mxu0 0
        %1926 = vmatpush1.bf16.msra.mxu0 %v1888
        %1927 = vmatprep.subr.bf16.mxu0 0
        %1928 = vmatpush1.bf16.msra.mxu0 %v1887
        %1929 = vmatprep.subr.bf16.mxu0 0
        %1930 = vmatpush1.bf16.msra.mxu0 %v1886
        %1931 = vmatprep.subr.bf16.mxu0 0
        %1932 = vmatpush1.bf16.msra.mxu0 %v1885
        %1933 = vmatprep.subr.bf16.mxu0 0
        %1934 = vmatpush2.bf16.msra.mxu0 %v1900
        %1935 = vmatprep.subr.bf16.mxu0 0
        %1936 = vmatpush2.bf16.msra.mxu0 %v1899
        %1937 = vmatprep.subr.bf16.mxu0 0
        %1938 = vmatpush2.bf16.msra.mxu0 %v1898
        %1939 = vmatprep.subr.bf16.mxu0 0
        %1940 = vmatpush2.bf16.msra.mxu0 %v1897
        %1941 = vmatprep.subr.bf16.mxu0 0
        %1942 = vmatpush2.bf16.msra.mxu0 %v1896
        %1943 = vmatprep.subr.bf16.mxu0 0
        %1944 = vmatpush2.bf16.msra.mxu0 %v1895
        %1945 = vmatprep.subr.bf16.mxu0 0
        %1946 = vmatpush2.bf16.msra.mxu0 %v1894
        %1947 = vmatprep.subr.bf16.mxu0 0
        %1948 = vmatpush2.bf16.msra.mxu0 %v1893
        %1949 = vmatprep.mubr.bf16.mxu0 %v1767
        %1950 = vmatmul.mubr.bf16.gmra.mxu0 %v1766
        %v1951 = vpop.f32.mrf.mxu0
        %v1952 = vadd.f32 %v1819, %v1951
        %v1953 = vpop.f32.mrf.mxu0
        %v1954 = vpop.f32.mrf.mxu0
        %v1955 = vadd.f32 %v1819, %v1954
        %v1956 = vpop.f32.mrf.mxu0
        %1957 = vmatprep.mubr.bf16.mxu0 %v1769
        %1958 = vmatmul.mubr.bf16.gmra.mxu0 %v1768
        %v1959 = vpop.f32.mrf.mxu0
        %v1960 = vadd.f32 %v1819, %v1959
        %v1961 = vpop.f32.mrf.mxu0
        %v1962 = vpop.f32.mrf.mxu0
        %v1963 = vadd.f32 %v1819, %v1962
        %v1964 = vpop.f32.mrf.mxu0
        %1965 = vmatprep.mubr.bf16.mxu0 %v1771
        %1966 = vmatmul.mubr.bf16.gmra.mxu0 %v1770
        %v1967 = vpop.f32.mrf.mxu0
        %v1968 = vadd.f32 %v1819, %v1967
        %v1969 = vpop.f32.mrf.mxu0
        %v1970 = vpop.f32.mrf.mxu0
        %v1971 = vadd.f32 %v1819, %v1970
        %v1972 = vpop.f32.mrf.mxu0
        %1973 = vmatprep.mubr.bf16.mxu0 %v1773
        %1974 = vmatmul.mubr.bf16.gmra.mxu0 %v1772
        %v1975 = vpop.f32.mrf.mxu0
        %v1976 = vadd.f32 %v1819, %v1975
        %v1977 = vpop.f32.mrf.mxu0
        %v1978 = vpop.f32.mrf.mxu0
        %v1979 = vadd.f32 %v1819, %v1978
        %v1980 = vpop.f32.mrf.mxu0
        %1981 = vmatprep.mubr.bf16.mxu0 %v1775
        %1982 = vmatmul.mubr.bf16.gmra.mxu0 %v1774
        %v1983 = vpop.f32.mrf.mxu0
        %v1984 = vadd.f32 %v1819, %v1983
        %v1985 = vpop.f32.mrf.mxu0
        %v1986 = vpop.f32.mrf.mxu0
        %v1987 = vadd.f32 %v1819, %v1986
        %v1988 = vpop.f32.mrf.mxu0
        %1989 = vmatprep.mubr.bf16.mxu0 %v1777
        %1990 = vmatmul.mubr.bf16.gmra.mxu0 %v1776
        %v1991 = vpop.f32.mrf.mxu0
        %v1992 = vadd.f32 %v1819, %v1991
        %v1993 = vpop.f32.mrf.mxu0
        %v1994 = vpop.f32.mrf.mxu0
        %v1995 = vadd.f32 %v1819, %v1994
        %v1996 = vpop.f32.mrf.mxu0
        %1997 = vmatprep.mubr.bf16.mxu0 %v1779
        %1998 = vmatmul.mubr.bf16.gmra.mxu0 %v1778
        %v1999 = vpop.f32.mrf.mxu0
        %v2000 = vadd.f32 %v1819, %v1999
        %v2001 = vpop.f32.mrf.mxu0
        %v2002 = vpop.f32.mrf.mxu0
        %v2003 = vadd.f32 %v1819, %v2002
        %v2004 = vpop.f32.mrf.mxu0
        %2005 = vmatprep.mubr.bf16.mxu0 %v1781
        %2006 = vmatmul.mubr.bf16.gmra.mxu0 %v1780
        %v2007 = vpop.f32.mrf.mxu0
        %v2008 = vadd.f32 %v1819, %v2007
        %v2009 = vpop.f32.mrf.mxu0
        %v2010 = vpop.f32.mrf.mxu0
        %v2011 = vadd.f32 %v1819, %v2010
        %v2012 = vpop.f32.mrf.mxu0
        %2013 = vdwg.mxu0
        %v2014 = vpack.c.bf16 %v1955, %v1952
        %v2015 = vpack.c.bf16 %v1963, %v1960
        %v2016 = vpack.c.bf16 %v1971, %v1968
        %v2017 = vpack.c.bf16 %v1979, %v1976
        %v2018 = vpack.c.bf16 %v1987, %v1984
        %v2019 = vpack.c.bf16 %v1995, %v1992
        %v2020 = vpack.c.bf16 %v2003, %v2000
        %v2021 = vpack.c.bf16 %v2011, %v2008
        %v2030 = vunpack.c.l.b16 %v2014
        %v2031 = vunpack.c.h.b16 %v2014
        %v2032 = vunpack.c.l.b16 %v2015
        %v2033 = vunpack.c.h.b16 %v2015
        %v2034 = vunpack.c.l.b16 %v2016
        %v2035 = vunpack.c.h.b16 %v2016
        %v2036 = vunpack.c.l.b16 %v2017
        %v2037 = vunpack.c.h.b16 %v2017
        %v2038 = vunpack.c.l.b16 %v2018
        %v2039 = vunpack.c.h.b16 %v2018
        %v2040 = vunpack.c.l.b16 %v2019
        %v2041 = vunpack.c.h.b16 %v2019
        %v2042 = vunpack.c.l.b16 %v2020
        %v2043 = vunpack.c.h.b16 %v2020
        %v2044 = vunpack.c.l.b16 %v2021
        %v2045 = vunpack.c.h.b16 %v2021
        %v2046 = vpack.c.b16 %v2030, %v2030
        %v2047 = vpack.c.b16 %v2031, %v2031
        %v2048 = vpack.c.b16 %v2032, %v2032
        %v2049 = vpack.c.b16 %v2033, %v2033
        %v2050 = vpack.c.b16 %v2034, %v2034
        %v2051 = vpack.c.b16 %v2035, %v2035
        %v2052 = vpack.c.b16 %v2036, %v2036
        %v2053 = vpack.c.b16 %v2037, %v2037
        %v2054 = vpack.c.b16 %v2038, %v2038
        %v2055 = vpack.c.b16 %v2039, %v2039
        %v2056 = vpack.c.b16 %v2040, %v2040
        %v2057 = vpack.c.b16 %v2041, %v2041
        %v2058 = vpack.c.b16 %v2042, %v2042
        %v2059 = vpack.c.b16 %v2043, %v2043
        %v2060 = vpack.c.b16 %v2044, %v2044
        %v2061 = vpack.c.b16 %v2045, %v2045
        %2078 = vst [vmem:[%s412] sm:$0xf] %v2046
        %2079 = vst [vmem:[%s412 + $0x4] sm:$0xf] %v2047
        %2080 = vst [vmem:[%s412 + $0x8] sm:$0xf] %v2048
        %2081 = vst [vmem:[%s412 + $0xc] sm:$0xf] %v2049
        %2082 = vst [vmem:[%s412 + $0x10] sm:$0xf] %v2050
        %2083 = vst [vmem:[%s412 + $0x14] sm:$0xf] %v2051
        %2084 = vst [vmem:[%s412 + $0x18] sm:$0xf] %v2052
        %2085 = vst [vmem:[%s412 + $0x1c] sm:$0xf] %v2053
        %2086 = vst [vmem:[%s412 + $0x20] sm:$0xf] %v2054
        %2087 = vst [vmem:[%s412 + $0x24] sm:$0xf] %v2055
        %2088 = vst [vmem:[%s412 + $0x28] sm:$0xf] %v2056
        %2089 = vst [vmem:[%s412 + $0x2c] sm:$0xf] %v2057
        %2090 = vst [vmem:[%s412 + $0x30] sm:$0xf] %v2058
        %2091 = vst [vmem:[%s412 + $0x34] sm:$0xf] %v2059
        %2092 = vst [vmem:[%s412 + $0x38] sm:$0xf] %v2060
        %2093 = vst [vmem:[%s412 + $0x3c] sm:$0xf] %v2061
        %s2094 = smul.u32 16, %s25
        %p2095 = scmp.lt.s32.totalorder %s2094, 63
        %s2096 = scalar_select %p2095, %s2094, 63
        %s2097 = smul.addr %s2096, 4
        %s2098 = scalar_lea.vmem %s9, %s2097
        // Predicated region
        $region77: #{lifting_network.1} parent=55 // pred_check
          %p2099 = pneg %p237
        $region78: #{lifting_network.1} parent=55 // pred_check_branch
          %2101 = sbr.rel (%p2099) target = $region80
        $region79: #{lifting_network.1} parent=55 // pred_region
          %s2102 = smul.u32 16, %s25
        $region80: #{lifting_network.1} parent=55 // pred_fallthru
          _
      $region56: #{lifting_network.1} parent=5 // pred_fallthru
        _
      %p2103 = scmp.le.s32.totalorder 2, %s20
      // Predicated region
      $region81: #{lifting_network.1} parent=5 // pred_check
        %p2104 = pneg %p2103
      $region82: #{lifting_network.1} parent=5 // pred_check_branch
        %2106 = sbr.rel (%p2104) target = $region84
      $region83: #{lifting_network.1} parent=5 // pred_region
        %s2107 = ssub.s32 %s20, 2
        // Predicated region
        $region85: #{lifting_network.1} parent=83 // pred_check
          %p2108 = pneg %p243
        $region86: #{lifting_network.1} parent=83 // pred_check_branch
          %2110 = sbr.rel (%p2108) target = $region88
        $region87: #{lifting_network.1} parent=83 // pred_region
          %s2111 = smul.u32 16, %s26
          %p2112 = scmp.lt.s32.totalorder %s2111, 63
          %s2113 = scalar_select %p2112, %s2111, 63
          %s2114 = smul.addr %s2113, 4
          %s2115 = scalar_lea.vmem %s9, %s2114
        $region88: #{lifting_network.1} parent=83 // pred_fallthru
          _
      $region84: #{lifting_network.1} parent=5 // pred_fallthru
        _
    $region6: #{lifting_network.1} parent=1 // loop_footer
      %s24 = sadd.s32 1, %s20
    $region7: #{lifting_network.1} parent=1 // loop_footer_branch
      %19 = sbr.rel target = $region3
    $region8: #{lifting_network.1} parent=1 // loop_exit
      _
    %2116 = vsyncpa [#allocation3], 1
    %s2117 = scalar_lea.sflag [#allocation3], 1
    %2118 = vsyncpa %s2117, 1
    %2119 = vsyncpa [#allocation5], 1
    %2120 = vsyncpa [#allocation8], 1

</llo_original>
